<compile_context>
chip_gen: v7x
topology: tpu7x:2x2x1
jax: 0.10.0
libtpu: 0.0.40
codegen_flags: <defaults>
</compile_context>

<pallas_src>
import numpy as np
import jax
import jax.numpy as jnp
from jax.experimental import pallas as pl
from jax.experimental.pallas import tpu as pltpu

BLOCK_B = 1  # images per grid step (grid stays >= 2 blocks for B >= 2 -> both v7x TCs busy)


# ----------------------------------------------------------------------------
# Fused whole-network kernel
# ----------------------------------------------------------------------------
def lenet_fused_kernel(x_ref, a1_ref, b1_ref, a2_ref, b2_ref,
                       f1_ref, fb1_ref, f2_ref, fb2_ref, f3_ref, fb3_ref, o_ref):
    """x_ref: (BLOCK_B, 4, 8, 96) f32, row-parity(mod 4) split image, lane = w*3+c.

    conv k: out[r, j, o] via banded weights A[kh] so that for a fixed kernel row kh the
    whole output row is ONE matmul row; pool(2,2) = elementwise max over the dw column
    blocks (folded into A's N layout) and the dh row chunks (folded into the M layout).
    relu(max_q(z_q) + b) == maxpool(relu(conv + b)) since the bias is per-channel.
    """
    def colmax(z):                       # (rows, 256) -> (rows, 128): max over dw quadrant
        return jnp.maximum(z[:, :128], z[:, 128:])

    b1v = b1_ref[...]
    b2v = b2_ref[...]

    for b in range(x_ref.shape[0]):
        # ---------------- conv1 + bias + ReLU + MaxPool(2,2) ----------------
        # output rows are laid out as 4 chunks of 7: (q,dh) in [(0,0),(0,1),(1,0),(1,1)],
        # chunk row t  <->  conv row r = 4t + 2q + dh, i.e. pooled row ip = 2t + q.
        z1 = None
        for kh in range(5):
            pieces = []
            for q in (0, 1):
                for dh in (0, 1):
                    s = 2 * q + dh + kh                      # input row = 4t + s
                    pieces.append(x_ref[b, s % 4, s // 4:s // 4 + 7, :])
            lhs = jnp.concatenate(pieces, axis=0).astype(jnp.bfloat16)   # (28, 96)
            d = jnp.dot(lhs, a1_ref[kh], preferred_element_type=jnp.float32)
            z1 = d if z1 is None else z1 + d                 # (28, 256) f32
        p1 = []                                              # parity-split pooled output
        for q in (0, 1):
            zq = jnp.maximum(colmax(z1[14 * q:14 * q + 7]),
                             colmax(z1[14 * q + 7:14 * q + 14]))          # max over dh
            p1.append(jnp.maximum(zq + b1v, 0.0))            # (7, 128), lane = jp*6+o
        # p1[q][t] == pool1 output row ip = 2t + q; lanes 84..127 are exactly zero.

        # ---------------- conv2 + bias + ReLU + MaxPool(2,2) ----------------
        z2 = None
        for kh in range(5):
            pieces = []
            for dh in (0, 1):
                s = dh + kh                                  # p1 row = 2*ip2 + s
                pieces.append(p1[s % 2][s // 2:s // 2 + 5, :])
            lhs = jnp.concatenate(pieces, axis=0).astype(jnp.bfloat16)   # (10, 128)
            d = jnp.dot(lhs, a2_ref[kh], preferred_element_type=jnp.float32)
            z2 = d if z2 is None else z2 + d                 # (10, 256) f32
        zt = jnp.maximum(colmax(z2[0:5]), colmax(z2[5:10]))  # max over dh
        p2 = jnp.maximum(zt + b2v, 0.0)                      # (5, 128), lane = jp2*16+o2

        # ---------------- fc1 + ReLU + fc2 + ReLU + fc3 ----------------------
        h = None
        for r in range(5):                                   # sum over pooled rows ip2
            d = jnp.dot(p2[r:r + 1, :].astype(jnp.bfloat16), f1_ref[r],
                        preferred_element_type=jnp.float32)
            h = d if h is None else h + d                    # (1, 128)
        h = jnp.maximum(h + fb1_ref[...], 0.0)
        h = jnp.dot(h.astype(jnp.bfloat16), f2_ref[...],
                    preferred_element_type=jnp.float32)
        h = jnp.maximum(h + fb2_ref[...], 0.0)
        out = jnp.dot(h.astype(jnp.bfloat16), f3_ref[...],
                      preferred_element_type=jnp.float32) + fb3_ref[...]  # (1, 128)
        o_ref[b] = out


# ----------------------------------------------------------------------------
# Parameters (PyTorch-like init) + one-time packing into banded kernel layouts
# ----------------------------------------------------------------------------
def init_params(key):
    def u(key, shape, fan_in):
        bound = 1.0 / jnp.sqrt(jnp.float32(fan_in))
        return jax.random.uniform(key, shape, jnp.float32, -bound, bound)

    keys = jax.random.split(key, 10)
    p = {}
    p["conv1_w"] = u(keys[0], (6, 3, 5, 5), 3 * 5 * 5)
    p["conv1_b"] = u(keys[1], (6,), 3 * 5 * 5)
    p["conv2_w"] = u(keys[2], (16, 6, 5, 5), 6 * 5 * 5)
    p["conv2_b"] = u(keys[3], (16,), 6 * 5 * 5)
    p["fc1_w"] = u(keys[4], (120, 400), 400)
    p["fc1_b"] = u(keys[5], (120,), 400)
    p["fc2_w"] = u(keys[6], (84, 120), 120)
    p["fc2_b"] = u(keys[7], (84,), 120)
    p["fc3_w"] = u(keys[8], (10, 84), 84)
    p["fc3_b"] = u(keys[9], (10,), 84)
    return p


def prep_params(p):
    """One-time host-side packing of PyTorch-layout params into banded bf16 weights."""
    W1 = np.asarray(p["conv1_w"], np.float32)   # (6, 3, 5, 5)  (O, C, KH, KW)
    b1 = np.asarray(p["conv1_b"], np.float32)
    W2 = np.asarray(p["conv2_w"], np.float32)   # (16, 6, 5, 5)
    b2 = np.asarray(p["conv2_b"], np.float32)
    F1w = np.asarray(p["fc1_w"], np.float32)    # (120, 400)
    F1b = np.asarray(p["fc1_b"], np.float32)
    F2w = np.asarray(p["fc2_w"], np.float32)    # (84, 120)
    F2b = np.asarray(p["fc2_b"], np.float32)
    F3w = np.asarray(p["fc3_w"], np.float32)    # (10, 84)
    F3b = np.asarray(p["fc3_b"], np.float32)

    # conv1 banded weights: rows = input lane (w*3+c), cols = dw*128 + jp*6 + o.
    A1 = np.zeros((5, 96, 256), np.float32)
    for kh in range(5):
        for dw in (0, 1):
            for jp in range(14):
                for kw in range(5):
                    r0 = (2 * jp + dw + kw) * 3
                    c0 = dw * 128 + jp * 6
                    A1[kh, r0:r0 + 3, c0:c0 + 6] = W1[:, :, kh, kw].T   # (c, o)

    # conv2 banded weights: rows = p1 lane (jp*6+ci), cols = dw*128 + jp2*16 + o2.
    A2 = np.zeros((5, 128, 256), np.float32)
    for kh in range(5):
        for dw in (0, 1):
            for jp2 in range(5):
                for kw in range(5):
                    r0 = (2 * jp2 + dw + kw) * 6
                    c0 = dw * 128 + jp2 * 16
                    A2[kh, r0:r0 + 6, c0:c0 + 16] = W2[:, :, kh, kw].T  # (ci, o2)

    # fc1 consumes p2 (rows ip2, lanes jp2*16+o2); PyTorch flatten order is (o2, ip2, jp2).
    F1 = np.zeros((5, 128, 128), np.float32)
    for ip2 in range(5):
        idx = np.array([o2 * 25 + ip2 * 5 + jp2 for jp2 in range(5) for o2 in range(16)])
        F1[ip2, :80, :120] = F1w[:, idx].T
    F2 = np.zeros((128, 128), np.float32)
    F2[:120, :84] = F2w.T
    F3 = np.zeros((128, 128), np.float32)
    F3[:84, :10] = F3w.T

    def lane_bias(vals, reps):
        v = np.zeros((1, 128), np.float32)
        t = np.tile(vals, reps)
        v[0, :t.size] = t
        return v

    return dict(
        a1=jnp.asarray(A1, jnp.bfloat16), b1=jnp.asarray(lane_bias(b1, 14)),
        a2=jnp.asarray(A2, jnp.bfloat16), b2=jnp.asarray(lane_bias(b2, 5)),
        f1=jnp.asarray(F1, jnp.bfloat16), fb1=jnp.asarray(lane_bias(F1b, 1)),
        f2=jnp.asarray(F2, jnp.bfloat16), fb2=jnp.asarray(lane_bias(F2b, 1)),
        f3=jnp.asarray(F3, jnp.bfloat16), fb3=jnp.asarray(lane_bias(F3b, 1)),
    )


# ----------------------------------------------------------------------------
# Forward pass (mirrors Net.forward), fully jitted: one pallas_call + tiny glue
# ----------------------------------------------------------------------------
@jax.jit
def net_forward(pp, x):
    """x: (B, 3, 32, 32) NCHW float32 -> logits (B, 10)."""
    B = x.shape[0]
    assert B % BLOCK_B == 0
    # Raw-input relayout only (12 KB/img): lane = w*3+c, rows split by (row mod 4).
    xh = jnp.transpose(x, (0, 2, 3, 1)).reshape(B, 32, 96)
    x4 = xh.reshape(B, 8, 4, 96).transpose(0, 2, 1, 3)          # (B, 4, 8, 96)

    def const(a):
        return pl.BlockSpec(a.shape, lambda i: (0,) * a.ndim)

    out = pl.pallas_call(
        lenet_fused_kernel,
        out_shape=jax.ShapeDtypeStruct((B, 1, 128), jnp.float32),
        grid=(B // BLOCK_B,),
        in_specs=[pl.BlockSpec((BLOCK_B, 4, 8, 96), lambda i: (i, 0, 0, 0)),
                  const(pp["a1"]), const(pp["b1"]),
                  const(pp["a2"]), const(pp["b2"]),
                  const(pp["f1"]), const(pp["fb1"]),
                  const(pp["f2"]), const(pp["fb2"]),
                  const(pp["f3"]), const(pp["fb3"])],
        out_specs=pl.BlockSpec((BLOCK_B, 1, 128), lambda i: (i, 0, 0)),
        compiler_params=pltpu.CompilerParams(dimension_semantics=("parallel",)),
    )(x4, pp["a1"], pp["b1"], pp["a2"], pp["b2"],
      pp["f1"], pp["fb1"], pp["f2"], pp["fb2"], pp["f3"], pp["fb3"])
    return out.reshape(B, 128)[:, :10]


def net_forward_ref(p, x):
    """Pure-JAX f32 reference following the PyTorch module exactly."""
    def conv(x, w, b):
        y = jax.lax.conv_general_dilated(
            x, w, window_strides=(1, 1), padding="VALID",
            dimension_numbers=("NCHW", "OIHW", "NCHW"))
        return jax.nn.relu(y + b[None, :, None, None])

    def pool(x):
        return jax.lax.reduce_window(
            x, -jnp.inf, jax.lax.max, (1, 1, 2, 2), (1, 1, 2, 2), "VALID")

    x = pool(conv(x, p["conv1_w"], p["conv1_b"]))
    x = pool(conv(x, p["conv2_w"], p["conv2_b"]))
    x = x.reshape(-1, 16 * 5 * 5)
    x = jax.nn.relu(x @ p["fc1_w"].T + p["fc1_b"])
    x = jax.nn.relu(x @ p["fc2_w"].T + p["fc2_b"])
    x = x @ p["fc3_w"].T + p["fc3_b"]
    return x


if __name__ == "__main__":
    key = jax.random.PRNGKey(0)
    pkey, xkey = jax.random.split(key)
    params = init_params(pkey)
    packed = prep_params(params)

    B = 2
    x = jax.random.normal(xkey, (B, 3, 32, 32), dtype=jnp.float32)  # CIFAR-sized input

    out = jax.block_until_ready(net_forward(packed, x))
    assert out.shape == (B, 10), out.shape

    ref = jax.block_until_ready(net_forward_ref(params, x))
    err = float(jnp.max(jnp.abs(out - ref)))
    # bf16 matmuls (f32 accumulation) -> relaxed tolerance vs f32 reference.
    assert jnp.allclose(out, ref, rtol=3e-2, atol=1e-2), err

    print("KERNEL_OK")
</pallas_src>

<mosaic_0001>
module attributes {stable_mosaic.version = 11 : i64} {
  func.func @lenet_fused_kernel(%arg0: i32, %arg1: memref<1x4x8x96xf32, #tpu.memory_space<vmem>>, %arg2: memref<5x96x256xbf16, #tpu.memory_space<vmem>>, %arg3: memref<1x128xf32, #tpu.memory_space<vmem>>, %arg4: memref<5x128x256xbf16, #tpu.memory_space<vmem>>, %arg5: memref<1x128xf32, #tpu.memory_space<vmem>>, %arg6: memref<5x128x128xbf16, #tpu.memory_space<vmem>>, %arg7: memref<1x128xf32, #tpu.memory_space<vmem>>, %arg8: memref<128x128xbf16, #tpu.memory_space<vmem>>, %arg9: memref<1x128xf32, #tpu.memory_space<vmem>>, %arg10: memref<128x128xbf16, #tpu.memory_space<vmem>>, %arg11: memref<1x128xf32, #tpu.memory_space<vmem>>, %arg12: memref<1x1x128xf32, #tpu.memory_space<vmem>>) attributes {dimension_semantics = [#tpu.dimension_semantics<parallel>], iteration_bounds = array<i64: 2>, scalar_prefetch = 0 : i64, scratch_operands = 0 : i64, tpu.core_type = #tpu.core_type<tc>, window_params = [{transform_indices = @transform_0, window_bounds = array<i64: 1, 4, 8, 96>}, {pipeline_mode = #tpu.pipeline_mode<synchronous>, transform_indices = @transform_1, window_bounds = array<i64: 5, 96, 256>}, {pipeline_mode = #tpu.pipeline_mode<synchronous>, transform_indices = @transform_2, window_bounds = array<i64: 1, 128>}, {pipeline_mode = #tpu.pipeline_mode<synchronous>, transform_indices = @transform_3, window_bounds = array<i64: 5, 128, 256>}, {pipeline_mode = #tpu.pipeline_mode<synchronous>, transform_indices = @transform_4, window_bounds = array<i64: 1, 128>}, {pipeline_mode = #tpu.pipeline_mode<synchronous>, transform_indices = @transform_5, window_bounds = array<i64: 5, 128, 128>}, {pipeline_mode = #tpu.pipeline_mode<synchronous>, transform_indices = @transform_6, window_bounds = array<i64: 1, 128>}, {pipeline_mode = #tpu.pipeline_mode<synchronous>, transform_indices = @transform_7, window_bounds = array<i64: 128, 128>}, {pipeline_mode = #tpu.pipeline_mode<synchronous>, transform_indices = @transform_8, window_bounds = array<i64: 1, 128>}, {pipeline_mode = #tpu.pipeline_mode<synchronous>, transform_indices = @transform_9, window_bounds = array<i64: 128, 128>}, {pipeline_mode = #tpu.pipeline_mode<synchronous>, transform_indices = @transform_10, window_bounds = array<i64: 1, 128>}, {transform_indices = @transform_11, window_bounds = array<i64: 1, 1, 128>}]} {
    %c0 = arith.constant 0 : index
    %c0_0 = arith.constant 0 : index
    %0 = vector.load %arg3[%c0, %c0_0] : memref<1x128xf32, #tpu.memory_space<vmem>>, vector<1x128xf32>
    %c0_1 = arith.constant 0 : index
    %c0_2 = arith.constant 0 : index
    %1 = vector.load %arg5[%c0_1, %c0_2] : memref<1x128xf32, #tpu.memory_space<vmem>>, vector<1x128xf32>
    %c0_3 = arith.constant 0 : index
    %c0_4 = arith.constant 0 : index
    %c0_5 = arith.constant 0 : index
    %c0_6 = arith.constant 0 : index
    %2 = vector.load %arg1[%c0_3, %c0_4, %c0_5, %c0_6] : memref<1x4x8x96xf32, #tpu.memory_space<vmem>>, vector<1x1x7x96xf32>
    %3 = vector.shape_cast %2 : vector<1x1x7x96xf32> to vector<7x96xf32>
    %c0_7 = arith.constant 0 : index
    %c1 = arith.constant 1 : index
    %c0_8 = arith.constant 0 : index
    %c0_9 = arith.constant 0 : index
    %4 = vector.load %arg1[%c0_7, %c1, %c0_8, %c0_9] : memref<1x4x8x96xf32, #tpu.memory_space<vmem>>, vector<1x1x7x96xf32>
    %5 = vector.shape_cast %4 : vector<1x1x7x96xf32> to vector<7x96xf32>
    %c0_10 = arith.constant 0 : index
    %c2 = arith.constant 2 : index
    %c0_11 = arith.constant 0 : index
    %c0_12 = arith.constant 0 : index
    %6 = vector.load %arg1[%c0_10, %c2, %c0_11, %c0_12] : memref<1x4x8x96xf32, #tpu.memory_space<vmem>>, vector<1x1x7x96xf32>
    %7 = vector.shape_cast %6 : vector<1x1x7x96xf32> to vector<7x96xf32>
    %c0_13 = arith.constant 0 : index
    %c3 = arith.constant 3 : index
    %c0_14 = arith.constant 0 : index
    %c0_15 = arith.constant 0 : index
    %8 = vector.load %arg1[%c0_13, %c3, %c0_14, %c0_15] : memref<1x4x8x96xf32, #tpu.memory_space<vmem>>, vector<1x1x7x96xf32>
    %9 = vector.shape_cast %8 : vector<1x1x7x96xf32> to vector<7x96xf32>
    %10 = tpu.concatenate %3, %5, %7, %9 in 0 : vector<7x96xf32>, vector<7x96xf32>, vector<7x96xf32>, vector<7x96xf32> -> vector<28x96xf32>
    %11 = arith.truncf %10 : vector<28x96xf32> to vector<28x96xbf16>
    %c0_16 = arith.constant 0 : index
    %c0_17 = arith.constant 0 : index
    %c0_18 = arith.constant 0 : index
    %12 = vector.load %arg2[%c0_16, %c0_17, %c0_18] : memref<5x96x256xbf16, #tpu.memory_space<vmem>>, vector<1x96x256xbf16>
    %13 = vector.shape_cast %12 : vector<1x96x256xbf16> to vector<96x256xbf16>
    %cst = arith.constant dense<0.000000e+00> : vector<28x256xf32>
    %14 = tpu.matmul %11, %13, %cst {dimension_numbers = #tpu.dot_dimension_numbers<[1], [0], [0], [1], [0, 0, 1, 1], [], []>} : vector<28x96xbf16>, vector<96x256xbf16>, vector<28x256xf32> -> vector<28x256xf32>
    %c0_19 = arith.constant 0 : index
    %c1_20 = arith.constant 1 : index
    %c0_21 = arith.constant 0 : index
    %c0_22 = arith.constant 0 : index
    %15 = vector.load %arg1[%c0_19, %c1_20, %c0_21, %c0_22] : memref<1x4x8x96xf32, #tpu.memory_space<vmem>>, vector<1x1x7x96xf32>
    %16 = vector.shape_cast %15 : vector<1x1x7x96xf32> to vector<7x96xf32>
    %c0_23 = arith.constant 0 : index
    %c2_24 = arith.constant 2 : index
    %c0_25 = arith.constant 0 : index
    %c0_26 = arith.constant 0 : index
    %17 = vector.load %arg1[%c0_23, %c2_24, %c0_25, %c0_26] : memref<1x4x8x96xf32, #tpu.memory_space<vmem>>, vector<1x1x7x96xf32>
    %18 = vector.shape_cast %17 : vector<1x1x7x96xf32> to vector<7x96xf32>
    %c0_27 = arith.constant 0 : index
    %c3_28 = arith.constant 3 : index
    %c0_29 = arith.constant 0 : index
    %c0_30 = arith.constant 0 : index
    %19 = vector.load %arg1[%c0_27, %c3_28, %c0_29, %c0_30] : memref<1x4x8x96xf32, #tpu.memory_space<vmem>>, vector<1x1x7x96xf32>
    %20 = vector.shape_cast %19 : vector<1x1x7x96xf32> to vector<7x96xf32>
    %c0_31 = arith.constant 0 : index
    %c0_32 = arith.constant 0 : index
    %c1_33 = arith.constant 1 : index
    %c0_34 = arith.constant 0 : index
    %21 = vector.load %arg1[%c0_31, %c0_32, %c1_33, %c0_34] : memref<1x4x8x96xf32, #tpu.memory_space<vmem>>, vector<1x1x7x96xf32>
    %22 = vector.shape_cast %21 : vector<1x1x7x96xf32> to vector<7x96xf32>
    %23 = tpu.concatenate %16, %18, %20, %22 in 0 : vector<7x96xf32>, vector<7x96xf32>, vector<7x96xf32>, vector<7x96xf32> -> vector<28x96xf32>
    %24 = arith.truncf %23 : vector<28x96xf32> to vector<28x96xbf16>
    %c1_35 = arith.constant 1 : index
    %c0_36 = arith.constant 0 : index
    %c0_37 = arith.constant 0 : index
    %25 = vector.load %arg2[%c1_35, %c0_36, %c0_37] : memref<5x96x256xbf16, #tpu.memory_space<vmem>>, vector<1x96x256xbf16>
    %26 = vector.shape_cast %25 : vector<1x96x256xbf16> to vector<96x256xbf16>
    %cst_38 = arith.constant dense<0.000000e+00> : vector<28x256xf32>
    %27 = tpu.matmul %24, %26, %cst_38 {dimension_numbers = #tpu.dot_dimension_numbers<[1], [0], [0], [1], [0, 0, 1, 1], [], []>} : vector<28x96xbf16>, vector<96x256xbf16>, vector<28x256xf32> -> vector<28x256xf32>
    %28 = arith.addf %14, %27 : vector<28x256xf32>
    %c0_39 = arith.constant 0 : index
    %c2_40 = arith.constant 2 : index
    %c0_41 = arith.constant 0 : index
    %c0_42 = arith.constant 0 : index
    %29 = vector.load %arg1[%c0_39, %c2_40, %c0_41, %c0_42] : memref<1x4x8x96xf32, #tpu.memory_space<vmem>>, vector<1x1x7x96xf32>
    %30 = vector.shape_cast %29 : vector<1x1x7x96xf32> to vector<7x96xf32>
    %c0_43 = arith.constant 0 : index
    %c3_44 = arith.constant 3 : index
    %c0_45 = arith.constant 0 : index
    %c0_46 = arith.constant 0 : index
    %31 = vector.load %arg1[%c0_43, %c3_44, %c0_45, %c0_46] : memref<1x4x8x96xf32, #tpu.memory_space<vmem>>, vector<1x1x7x96xf32>
    %32 = vector.shape_cast %31 : vector<1x1x7x96xf32> to vector<7x96xf32>
    %c0_47 = arith.constant 0 : index
    %c0_48 = arith.constant 0 : index
    %c1_49 = arith.constant 1 : index
    %c0_50 = arith.constant 0 : index
    %33 = vector.load %arg1[%c0_47, %c0_48, %c1_49, %c0_50] : memref<1x4x8x96xf32, #tpu.memory_space<vmem>>, vector<1x1x7x96xf32>
    %34 = vector.shape_cast %33 : vector<1x1x7x96xf32> to vector<7x96xf32>
    %c0_51 = arith.constant 0 : index
    %c1_52 = arith.constant 1 : index
    %c1_53 = arith.constant 1 : index
    %c0_54 = arith.constant 0 : index
    %35 = vector.load %arg1[%c0_51, %c1_52, %c1_53, %c0_54] : memref<1x4x8x96xf32, #tpu.memory_space<vmem>>, vector<1x1x7x96xf32>
    %36 = vector.shape_cast %35 : vector<1x1x7x96xf32> to vector<7x96xf32>
    %37 = tpu.concatenate %30, %32, %34, %36 in 0 : vector<7x96xf32>, vector<7x96xf32>, vector<7x96xf32>, vector<7x96xf32> -> vector<28x96xf32>
    %38 = arith.truncf %37 : vector<28x96xf32> to vector<28x96xbf16>
    %c2_55 = arith.constant 2 : index
    %c0_56 = arith.constant 0 : index
    %c0_57 = arith.constant 0 : index
    %39 = vector.load %arg2[%c2_55, %c0_56, %c0_57] : memref<5x96x256xbf16, #tpu.memory_space<vmem>>, vector<1x96x256xbf16>
    %40 = vector.shape_cast %39 : vector<1x96x256xbf16> to vector<96x256xbf16>
    %cst_58 = arith.constant dense<0.000000e+00> : vector<28x256xf32>
    %41 = tpu.matmul %38, %40, %cst_58 {dimension_numbers = #tpu.dot_dimension_numbers<[1], [0], [0], [1], [0, 0, 1, 1], [], []>} : vector<28x96xbf16>, vector<96x256xbf16>, vector<28x256xf32> -> vector<28x256xf32>
    %42 = arith.addf %28, %41 : vector<28x256xf32>
    %c0_59 = arith.constant 0 : index
    %c3_60 = arith.constant 3 : index
    %c0_61 = arith.constant 0 : index
    %c0_62 = arith.constant 0 : index
    %43 = vector.load %arg1[%c0_59, %c3_60, %c0_61, %c0_62] : memref<1x4x8x96xf32, #tpu.memory_space<vmem>>, vector<1x1x7x96xf32>
    %44 = vector.shape_cast %43 : vector<1x1x7x96xf32> to vector<7x96xf32>
    %c0_63 = arith.constant 0 : index
    %c0_64 = arith.constant 0 : index
    %c1_65 = arith.constant 1 : index
    %c0_66 = arith.constant 0 : index
    %45 = vector.load %arg1[%c0_63, %c0_64, %c1_65, %c0_66] : memref<1x4x8x96xf32, #tpu.memory_space<vmem>>, vector<1x1x7x96xf32>
    %46 = vector.shape_cast %45 : vector<1x1x7x96xf32> to vector<7x96xf32>
    %c0_67 = arith.constant 0 : index
    %c1_68 = arith.constant 1 : index
    %c1_69 = arith.constant 1 : index
    %c0_70 = arith.constant 0 : index
    %47 = vector.load %arg1[%c0_67, %c1_68, %c1_69, %c0_70] : memref<1x4x8x96xf32, #tpu.memory_space<vmem>>, vector<1x1x7x96xf32>
    %48 = vector.shape_cast %47 : vector<1x1x7x96xf32> to vector<7x96xf32>
    %c0_71 = arith.constant 0 : index
    %c2_72 = arith.constant 2 : index
    %c1_73 = arith.constant 1 : index
    %c0_74 = arith.constant 0 : index
    %49 = vector.load %arg1[%c0_71, %c2_72, %c1_73, %c0_74] : memref<1x4x8x96xf32, #tpu.memory_space<vmem>>, vector<1x1x7x96xf32>
    %50 = vector.shape_cast %49 : vector<1x1x7x96xf32> to vector<7x96xf32>
    %51 = tpu.concatenate %44, %46, %48, %50 in 0 : vector<7x96xf32>, vector<7x96xf32>, vector<7x96xf32>, vector<7x96xf32> -> vector<28x96xf32>
    %52 = arith.truncf %51 : vector<28x96xf32> to vector<28x96xbf16>
    %c3_75 = arith.constant 3 : index
    %c0_76 = arith.constant 0 : index
    %c0_77 = arith.constant 0 : index
    %53 = vector.load %arg2[%c3_75, %c0_76, %c0_77] : memref<5x96x256xbf16, #tpu.memory_space<vmem>>, vector<1x96x256xbf16>
    %54 = vector.shape_cast %53 : vector<1x96x256xbf16> to vector<96x256xbf16>
    %cst_78 = arith.constant dense<0.000000e+00> : vector<28x256xf32>
    %55 = tpu.matmul %52, %54, %cst_78 {dimension_numbers = #tpu.dot_dimension_numbers<[1], [0], [0], [1], [0, 0, 1, 1], [], []>} : vector<28x96xbf16>, vector<96x256xbf16>, vector<28x256xf32> -> vector<28x256xf32>
    %56 = arith.addf %42, %55 : vector<28x256xf32>
    %c0_79 = arith.constant 0 : index
    %c0_80 = arith.constant 0 : index
    %c1_81 = arith.constant 1 : index
    %c0_82 = arith.constant 0 : index
    %57 = vector.load %arg1[%c0_79, %c0_80, %c1_81, %c0_82] : memref<1x4x8x96xf32, #tpu.memory_space<vmem>>, vector<1x1x7x96xf32>
    %58 = vector.shape_cast %57 : vector<1x1x7x96xf32> to vector<7x96xf32>
    %c0_83 = arith.constant 0 : index
    %c1_84 = arith.constant 1 : index
    %c1_85 = arith.constant 1 : index
    %c0_86 = arith.constant 0 : index
    %59 = vector.load %arg1[%c0_83, %c1_84, %c1_85, %c0_86] : memref<1x4x8x96xf32, #tpu.memory_space<vmem>>, vector<1x1x7x96xf32>
    %60 = vector.shape_cast %59 : vector<1x1x7x96xf32> to vector<7x96xf32>
    %c0_87 = arith.constant 0 : index
    %c2_88 = arith.constant 2 : index
    %c1_89 = arith.constant 1 : index
    %c0_90 = arith.constant 0 : index
    %61 = vector.load %arg1[%c0_87, %c2_88, %c1_89, %c0_90] : memref<1x4x8x96xf32, #tpu.memory_space<vmem>>, vector<1x1x7x96xf32>
    %62 = vector.shape_cast %61 : vector<1x1x7x96xf32> to vector<7x96xf32>
    %c0_91 = arith.constant 0 : index
    %c3_92 = arith.constant 3 : index
    %c1_93 = arith.constant 1 : index
    %c0_94 = arith.constant 0 : index
    %63 = vector.load %arg1[%c0_91, %c3_92, %c1_93, %c0_94] : memref<1x4x8x96xf32, #tpu.memory_space<vmem>>, vector<1x1x7x96xf32>
    %64 = vector.shape_cast %63 : vector<1x1x7x96xf32> to vector<7x96xf32>
    %65 = tpu.concatenate %58, %60, %62, %64 in 0 : vector<7x96xf32>, vector<7x96xf32>, vector<7x96xf32>, vector<7x96xf32> -> vector<28x96xf32>
    %66 = arith.truncf %65 : vector<28x96xf32> to vector<28x96xbf16>
    %c4 = arith.constant 4 : index
    %c0_95 = arith.constant 0 : index
    %c0_96 = arith.constant 0 : index
    %67 = vector.load %arg2[%c4, %c0_95, %c0_96] : memref<5x96x256xbf16, #tpu.memory_space<vmem>>, vector<1x96x256xbf16>
    %68 = vector.shape_cast %67 : vector<1x96x256xbf16> to vector<96x256xbf16>
    %cst_97 = arith.constant dense<0.000000e+00> : vector<28x256xf32>
    %69 = tpu.matmul %66, %68, %cst_97 {dimension_numbers = #tpu.dot_dimension_numbers<[1], [0], [0], [1], [0, 0, 1, 1], [], []>} : vector<28x96xbf16>, vector<96x256xbf16>, vector<28x256xf32> -> vector<28x256xf32>
    %70 = arith.addf %56, %69 : vector<28x256xf32>
    %71 = vector.extract_strided_slice %70 {offsets = [0, 0], sizes = [7, 256], strides = [1, 1]} : vector<28x256xf32> to vector<7x256xf32>
    %72 = vector.extract_strided_slice %71 {offsets = [0, 0], sizes = [7, 128], strides = [1, 1]} : vector<7x256xf32> to vector<7x128xf32>
    %73 = vector.extract_strided_slice %71 {offsets = [0, 128], sizes = [7, 128], strides = [1, 1]} : vector<7x256xf32> to vector<7x128xf32>
    %74 = arith.maximumf %72, %73 : vector<7x128xf32>
    %75 = vector.extract_strided_slice %70 {offsets = [7, 0], sizes = [7, 256], strides = [1, 1]} : vector<28x256xf32> to vector<7x256xf32>
    %76 = vector.extract_strided_slice %75 {offsets = [0, 0], sizes = [7, 128], strides = [1, 1]} : vector<7x256xf32> to vector<7x128xf32>
    %77 = vector.extract_strided_slice %75 {offsets = [0, 128], sizes = [7, 128], strides = [1, 1]} : vector<7x256xf32> to vector<7x128xf32>
    %78 = arith.maximumf %76, %77 : vector<7x128xf32>
    %79 = arith.maximumf %74, %78 : vector<7x128xf32>
    %80 = vector.broadcast %0 : vector<1x128xf32> to vector<7x128xf32>
    %81 = arith.addf %79, %80 : vector<7x128xf32>
    %cst_98 = arith.constant 0.000000e+00 : f32
    %82 = vector.broadcast %cst_98 : f32 to vector<7x128xf32>
    %83 = arith.maximumf %81, %82 : vector<7x128xf32>
    %84 = vector.extract_strided_slice %70 {offsets = [14, 0], sizes = [7, 256], strides = [1, 1]} : vector<28x256xf32> to vector<7x256xf32>
    %85 = vector.extract_strided_slice %84 {offsets = [0, 0], sizes = [7, 128], strides = [1, 1]} : vector<7x256xf32> to vector<7x128xf32>
    %86 = vector.extract_strided_slice %84 {offsets = [0, 128], sizes = [7, 128], strides = [1, 1]} : vector<7x256xf32> to vector<7x128xf32>
    %87 = arith.maximumf %85, %86 : vector<7x128xf32>
    %88 = vector.extract_strided_slice %70 {offsets = [21, 0], sizes = [7, 256], strides = [1, 1]} : vector<28x256xf32> to vector<7x256xf32>
    %89 = vector.extract_strided_slice %88 {offsets = [0, 0], sizes = [7, 128], strides = [1, 1]} : vector<7x256xf32> to vector<7x128xf32>
    %90 = vector.extract_strided_slice %88 {offsets = [0, 128], sizes = [7, 128], strides = [1, 1]} : vector<7x256xf32> to vector<7x128xf32>
    %91 = arith.maximumf %89, %90 : vector<7x128xf32>
    %92 = arith.maximumf %87, %91 : vector<7x128xf32>
    %93 = vector.broadcast %0 : vector<1x128xf32> to vector<7x128xf32>
    %94 = arith.addf %92, %93 : vector<7x128xf32>
    %cst_99 = arith.constant 0.000000e+00 : f32
    %95 = vector.broadcast %cst_99 : f32 to vector<7x128xf32>
    %96 = arith.maximumf %94, %95 : vector<7x128xf32>
    %97 = vector.extract_strided_slice %83 {offsets = [0, 0], sizes = [5, 128], strides = [1, 1]} : vector<7x128xf32> to vector<5x128xf32>
    %98 = vector.extract_strided_slice %96 {offsets = [0, 0], sizes = [5, 128], strides = [1, 1]} : vector<7x128xf32> to vector<5x128xf32>
    %99 = tpu.concatenate %97, %98 in 0 : vector<5x128xf32>, vector<5x128xf32> -> vector<10x128xf32>
    %100 = arith.truncf %99 : vector<10x128xf32> to vector<10x128xbf16>
    %c0_100 = arith.constant 0 : index
    %c0_101 = arith.constant 0 : index
    %c0_102 = arith.constant 0 : index
    %101 = vector.load %arg4[%c0_100, %c0_101, %c0_102] : memref<5x128x256xbf16, #tpu.memory_space<vmem>>, vector<1x128x256xbf16>
    %102 = vector.shape_cast %101 : vector<1x128x256xbf16> to vector<128x256xbf16>
    %cst_103 = arith.constant dense<0.000000e+00> : vector<10x256xf32>
    %103 = tpu.matmul %100, %102, %cst_103 {dimension_numbers = #tpu.dot_dimension_numbers<[1], [0], [0], [1], [0, 0, 1, 1], [], []>} : vector<10x128xbf16>, vector<128x256xbf16>, vector<10x256xf32> -> vector<10x256xf32>
    %104 = vector.extract_strided_slice %96 {offsets = [0, 0], sizes = [5, 128], strides = [1, 1]} : vector<7x128xf32> to vector<5x128xf32>
    %105 = vector.extract_strided_slice %83 {offsets = [1, 0], sizes = [5, 128], strides = [1, 1]} : vector<7x128xf32> to vector<5x128xf32>
    %106 = tpu.concatenate %104, %105 in 0 : vector<5x128xf32>, vector<5x128xf32> -> vector<10x128xf32>
    %107 = arith.truncf %106 : vector<10x128xf32> to vector<10x128xbf16>
    %c1_104 = arith.constant 1 : index
    %c0_105 = arith.constant 0 : index
    %c0_106 = arith.constant 0 : index
    %108 = vector.load %arg4[%c1_104, %c0_105, %c0_106] : memref<5x128x256xbf16, #tpu.memory_space<vmem>>, vector<1x128x256xbf16>
    %109 = vector.shape_cast %108 : vector<1x128x256xbf16> to vector<128x256xbf16>
    %cst_107 = arith.constant dense<0.000000e+00> : vector<10x256xf32>
    %110 = tpu.matmul %107, %109, %cst_107 {dimension_numbers = #tpu.dot_dimension_numbers<[1], [0], [0], [1], [0, 0, 1, 1], [], []>} : vector<10x128xbf16>, vector<128x256xbf16>, vector<10x256xf32> -> vector<10x256xf32>
    %111 = arith.addf %103, %110 : vector<10x256xf32>
    %112 = vector.extract_strided_slice %83 {offsets = [1, 0], sizes = [5, 128], strides = [1, 1]} : vector<7x128xf32> to vector<5x128xf32>
    %113 = vector.extract_strided_slice %96 {offsets = [1, 0], sizes = [5, 128], strides = [1, 1]} : vector<7x128xf32> to vector<5x128xf32>
    %114 = tpu.concatenate %112, %113 in 0 : vector<5x128xf32>, vector<5x128xf32> -> vector<10x128xf32>
    %115 = arith.truncf %114 : vector<10x128xf32> to vector<10x128xbf16>
    %c2_108 = arith.constant 2 : index
    %c0_109 = arith.constant 0 : index
    %c0_110 = arith.constant 0 : index
    %116 = vector.load %arg4[%c2_108, %c0_109, %c0_110] : memref<5x128x256xbf16, #tpu.memory_space<vmem>>, vector<1x128x256xbf16>
    %117 = vector.shape_cast %116 : vector<1x128x256xbf16> to vector<128x256xbf16>
    %cst_111 = arith.constant dense<0.000000e+00> : vector<10x256xf32>
    %118 = tpu.matmul %115, %117, %cst_111 {dimension_numbers = #tpu.dot_dimension_numbers<[1], [0], [0], [1], [0, 0, 1, 1], [], []>} : vector<10x128xbf16>, vector<128x256xbf16>, vector<10x256xf32> -> vector<10x256xf32>
    %119 = arith.addf %111, %118 : vector<10x256xf32>
    %120 = vector.extract_strided_slice %96 {offsets = [1, 0], sizes = [5, 128], strides = [1, 1]} : vector<7x128xf32> to vector<5x128xf32>
    %121 = vector.extract_strided_slice %83 {offsets = [2, 0], sizes = [5, 128], strides = [1, 1]} : vector<7x128xf32> to vector<5x128xf32>
    %122 = tpu.concatenate %120, %121 in 0 : vector<5x128xf32>, vector<5x128xf32> -> vector<10x128xf32>
    %123 = arith.truncf %122 : vector<10x128xf32> to vector<10x128xbf16>
    %c3_112 = arith.constant 3 : index
    %c0_113 = arith.constant 0 : index
    %c0_114 = arith.constant 0 : index
    %124 = vector.load %arg4[%c3_112, %c0_113, %c0_114] : memref<5x128x256xbf16, #tpu.memory_space<vmem>>, vector<1x128x256xbf16>
    %125 = vector.shape_cast %124 : vector<1x128x256xbf16> to vector<128x256xbf16>
    %cst_115 = arith.constant dense<0.000000e+00> : vector<10x256xf32>
    %126 = tpu.matmul %123, %125, %cst_115 {dimension_numbers = #tpu.dot_dimension_numbers<[1], [0], [0], [1], [0, 0, 1, 1], [], []>} : vector<10x128xbf16>, vector<128x256xbf16>, vector<10x256xf32> -> vector<10x256xf32>
    %127 = arith.addf %119, %126 : vector<10x256xf32>
    %128 = vector.extract_strided_slice %83 {offsets = [2, 0], sizes = [5, 128], strides = [1, 1]} : vector<7x128xf32> to vector<5x128xf32>
    %129 = vector.extract_strided_slice %96 {offsets = [2, 0], sizes = [5, 128], strides = [1, 1]} : vector<7x128xf32> to vector<5x128xf32>
    %130 = tpu.concatenate %128, %129 in 0 : vector<5x128xf32>, vector<5x128xf32> -> vector<10x128xf32>
    %131 = arith.truncf %130 : vector<10x128xf32> to vector<10x128xbf16>
    %c4_116 = arith.constant 4 : index
    %c0_117 = arith.constant 0 : index
    %c0_118 = arith.constant 0 : index
    %132 = vector.load %arg4[%c4_116, %c0_117, %c0_118] : memref<5x128x256xbf16, #tpu.memory_space<vmem>>, vector<1x128x256xbf16>
    %133 = vector.shape_cast %132 : vector<1x128x256xbf16> to vector<128x256xbf16>
    %cst_119 = arith.constant dense<0.000000e+00> : vector<10x256xf32>
    %134 = tpu.matmul %131, %133, %cst_119 {dimension_numbers = #tpu.dot_dimension_numbers<[1], [0], [0], [1], [0, 0, 1, 1], [], []>} : vector<10x128xbf16>, vector<128x256xbf16>, vector<10x256xf32> -> vector<10x256xf32>
    %135 = arith.addf %127, %134 : vector<10x256xf32>
    %136 = vector.extract_strided_slice %135 {offsets = [0, 0], sizes = [5, 256], strides = [1, 1]} : vector<10x256xf32> to vector<5x256xf32>
    %137 = vector.extract_strided_slice %136 {offsets = [0, 0], sizes = [5, 128], strides = [1, 1]} : vector<5x256xf32> to vector<5x128xf32>
    %138 = vector.extract_strided_slice %136 {offsets = [0, 128], sizes = [5, 128], strides = [1, 1]} : vector<5x256xf32> to vector<5x128xf32>
    %139 = arith.maximumf %137, %138 : vector<5x128xf32>
    %140 = vector.extract_strided_slice %135 {offsets = [5, 0], sizes = [5, 256], strides = [1, 1]} : vector<10x256xf32> to vector<5x256xf32>
    %141 = vector.extract_strided_slice %140 {offsets = [0, 0], sizes = [5, 128], strides = [1, 1]} : vector<5x256xf32> to vector<5x128xf32>
    %142 = vector.extract_strided_slice %140 {offsets = [0, 128], sizes = [5, 128], strides = [1, 1]} : vector<5x256xf32> to vector<5x128xf32>
    %143 = arith.maximumf %141, %142 : vector<5x128xf32>
    %144 = arith.maximumf %139, %143 : vector<5x128xf32>
    %145 = vector.broadcast %1 : vector<1x128xf32> to vector<5x128xf32>
    %146 = arith.addf %144, %145 : vector<5x128xf32>
    %cst_120 = arith.constant 0.000000e+00 : f32
    %147 = vector.broadcast %cst_120 : f32 to vector<5x128xf32>
    %148 = arith.maximumf %146, %147 : vector<5x128xf32>
    %149 = vector.extract_strided_slice %148 {offsets = [0, 0], sizes = [1, 128], strides = [1, 1]} : vector<5x128xf32> to vector<1x128xf32>
    %150 = arith.truncf %149 : vector<1x128xf32> to vector<1x128xbf16>
    %c0_121 = arith.constant 0 : index
    %c0_122 = arith.constant 0 : index
    %c0_123 = arith.constant 0 : index
    %151 = vector.load %arg6[%c0_121, %c0_122, %c0_123] : memref<5x128x128xbf16, #tpu.memory_space<vmem>>, vector<1x128x128xbf16>
    %152 = vector.shape_cast %151 : vector<1x128x128xbf16> to vector<128x128xbf16>
    %cst_124 = arith.constant dense<0.000000e+00> : vector<1x128xf32>
    %153 = tpu.matmul %150, %152, %cst_124 {dimension_numbers = #tpu.dot_dimension_numbers<[1], [0], [0], [1], [0, 0, 1, 1], [], []>} : vector<1x128xbf16>, vector<128x128xbf16>, vector<1x128xf32> -> vector<1x128xf32>
    %154 = vector.extract_strided_slice %148 {offsets = [1, 0], sizes = [1, 128], strides = [1, 1]} : vector<5x128xf32> to vector<1x128xf32>
    %155 = arith.truncf %154 : vector<1x128xf32> to vector<1x128xbf16>
    %c1_125 = arith.constant 1 : index
    %c0_126 = arith.constant 0 : index
    %c0_127 = arith.constant 0 : index
    %156 = vector.load %arg6[%c1_125, %c0_126, %c0_127] : memref<5x128x128xbf16, #tpu.memory_space<vmem>>, vector<1x128x128xbf16>
    %157 = vector.shape_cast %156 : vector<1x128x128xbf16> to vector<128x128xbf16>
    %cst_128 = arith.constant dense<0.000000e+00> : vector<1x128xf32>
    %158 = tpu.matmul %155, %157, %cst_128 {dimension_numbers = #tpu.dot_dimension_numbers<[1], [0], [0], [1], [0, 0, 1, 1], [], []>} : vector<1x128xbf16>, vector<128x128xbf16>, vector<1x128xf32> -> vector<1x128xf32>
    %159 = arith.addf %153, %158 : vector<1x128xf32>
    %160 = vector.extract_strided_slice %148 {offsets = [2, 0], sizes = [1, 128], strides = [1, 1]} : vector<5x128xf32> to vector<1x128xf32>
    %161 = arith.truncf %160 : vector<1x128xf32> to vector<1x128xbf16>
    %c2_129 = arith.constant 2 : index
    %c0_130 = arith.constant 0 : index
    %c0_131 = arith.constant 0 : index
    %162 = vector.load %arg6[%c2_129, %c0_130, %c0_131] : memref<5x128x128xbf16, #tpu.memory_space<vmem>>, vector<1x128x128xbf16>
    %163 = vector.shape_cast %162 : vector<1x128x128xbf16> to vector<128x128xbf16>
    %cst_132 = arith.constant dense<0.000000e+00> : vector<1x128xf32>
    %164 = tpu.matmul %161, %163, %cst_132 {dimension_numbers = #tpu.dot_dimension_numbers<[1], [0], [0], [1], [0, 0, 1, 1], [], []>} : vector<1x128xbf16>, vector<128x128xbf16>, vector<1x128xf32> -> vector<1x128xf32>
    %165 = arith.addf %159, %164 : vector<1x128xf32>
    %166 = vector.extract_strided_slice %148 {offsets = [3, 0], sizes = [1, 128], strides = [1, 1]} : vector<5x128xf32> to vector<1x128xf32>
    %167 = arith.truncf %166 : vector<1x128xf32> to vector<1x128xbf16>
    %c3_133 = arith.constant 3 : index
    %c0_134 = arith.constant 0 : index
    %c0_135 = arith.constant 0 : index
    %168 = vector.load %arg6[%c3_133, %c0_134, %c0_135] : memref<5x128x128xbf16, #tpu.memory_space<vmem>>, vector<1x128x128xbf16>
    %169 = vector.shape_cast %168 : vector<1x128x128xbf16> to vector<128x128xbf16>
    %cst_136 = arith.constant dense<0.000000e+00> : vector<1x128xf32>
    %170 = tpu.matmul %167, %169, %cst_136 {dimension_numbers = #tpu.dot_dimension_numbers<[1], [0], [0], [1], [0, 0, 1, 1], [], []>} : vector<1x128xbf16>, vector<128x128xbf16>, vector<1x128xf32> -> vector<1x128xf32>
    %171 = arith.addf %165, %170 : vector<1x128xf32>
    %172 = vector.extract_strided_slice %148 {offsets = [4, 0], sizes = [1, 128], strides = [1, 1]} : vector<5x128xf32> to vector<1x128xf32>
    %173 = arith.truncf %172 : vector<1x128xf32> to vector<1x128xbf16>
    %c4_137 = arith.constant 4 : index
    %c0_138 = arith.constant 0 : index
    %c0_139 = arith.constant 0 : index
    %174 = vector.load %arg6[%c4_137, %c0_138, %c0_139] : memref<5x128x128xbf16, #tpu.memory_space<vmem>>, vector<1x128x128xbf16>
    %175 = vector.shape_cast %174 : vector<1x128x128xbf16> to vector<128x128xbf16>
    %cst_140 = arith.constant dense<0.000000e+00> : vector<1x128xf32>
    %176 = tpu.matmul %173, %175, %cst_140 {dimension_numbers = #tpu.dot_dimension_numbers<[1], [0], [0], [1], [0, 0, 1, 1], [], []>} : vector<1x128xbf16>, vector<128x128xbf16>, vector<1x128xf32> -> vector<1x128xf32>
    %177 = arith.addf %171, %176 : vector<1x128xf32>
    %c0_141 = arith.constant 0 : index
    %c0_142 = arith.constant 0 : index
    %178 = vector.load %arg7[%c0_141, %c0_142] : memref<1x128xf32, #tpu.memory_space<vmem>>, vector<1x128xf32>
    %179 = arith.addf %177, %178 : vector<1x128xf32>
    %cst_143 = arith.constant 0.000000e+00 : f32
    %180 = vector.broadcast %cst_143 : f32 to vector<1x128xf32>
    %181 = arith.maximumf %179, %180 : vector<1x128xf32>
    %182 = arith.truncf %181 : vector<1x128xf32> to vector<1x128xbf16>
    %c0_144 = arith.constant 0 : index
    %c0_145 = arith.constant 0 : index
    %183 = vector.load %arg8[%c0_144, %c0_145] : memref<128x128xbf16, #tpu.memory_space<vmem>>, vector<128x128xbf16>
    %cst_146 = arith.constant dense<0.000000e+00> : vector<1x128xf32>
    %184 = tpu.matmul %182, %183, %cst_146 {dimension_numbers = #tpu.dot_dimension_numbers<[1], [0], [0], [1], [0, 0, 1, 1], [], []>} : vector<1x128xbf16>, vector<128x128xbf16>, vector<1x128xf32> -> vector<1x128xf32>
    %c0_147 = arith.constant 0 : index
    %c0_148 = arith.constant 0 : index
    %185 = vector.load %arg9[%c0_147, %c0_148] : memref<1x128xf32, #tpu.memory_space<vmem>>, vector<1x128xf32>
    %186 = arith.addf %184, %185 : vector<1x128xf32>
    %cst_149 = arith.constant 0.000000e+00 : f32
    %187 = vector.broadcast %cst_149 : f32 to vector<1x128xf32>
    %188 = arith.maximumf %186, %187 : vector<1x128xf32>
    %189 = arith.truncf %188 : vector<1x128xf32> to vector<1x128xbf16>
    %c0_150 = arith.constant 0 : index
    %c0_151 = arith.constant 0 : index
    %190 = vector.load %arg10[%c0_150, %c0_151] : memref<128x128xbf16, #tpu.memory_space<vmem>>, vector<128x128xbf16>
    %cst_152 = arith.constant dense<0.000000e+00> : vector<1x128xf32>
    %191 = tpu.matmul %189, %190, %cst_152 {dimension_numbers = #tpu.dot_dimension_numbers<[1], [0], [0], [1], [0, 0, 1, 1], [], []>} : vector<1x128xbf16>, vector<128x128xbf16>, vector<1x128xf32> -> vector<1x128xf32>
    %c0_153 = arith.constant 0 : index
    %c0_154 = arith.constant 0 : index
    %192 = vector.load %arg11[%c0_153, %c0_154] : memref<1x128xf32, #tpu.memory_space<vmem>>, vector<1x128xf32>
    %193 = arith.addf %191, %192 : vector<1x128xf32>
    %c0_155 = arith.constant 0 : index
    %c0_156 = arith.constant 0 : index
    %c0_157 = arith.constant 0 : index
    %194 = vector.load %arg12[%c0_155, %c0_156, %c0_157] : memref<1x1x128xf32, #tpu.memory_space<vmem>>, vector<1x1x128xf32>
    %195 = vector.shape_cast %194 : vector<1x1x128xf32> to vector<1x128xf32>
    %196 = vector.shape_cast %193 : vector<1x128xf32> to vector<1x1x128xf32>
    tpu.vector_store %arg12[%c0_155, %c0_156, %c0_157], %196 {strides = array<i32>} : memref<1x1x128xf32, #tpu.memory_space<vmem>>, vector<1x1x128xf32>,
    return
  }
  func.func @transform_0(%arg0: i32) -> (i32, i32, i32, i32) {
    %c0_i32 = arith.constant 0 : i32
    %c0_i32_0 = arith.constant 0 : i32
    %c0_i32_1 = arith.constant 0 : i32
    %c0_i32_2 = arith.constant 0 : i32
    return %arg0, %c0_i32, %c0_i32_0, %c0_i32_1 : i32, i32, i32, i32
  }
  func.func @transform_1(%arg0: i32) -> (i32, i32, i32) {
    %c0_i32 = arith.constant 0 : i32
    %c0_i32_0 = arith.constant 0 : i32
    %c0_i32_1 = arith.constant 0 : i32
    %c0_i32_2 = arith.constant 0 : i32
    return %c0_i32, %c0_i32_0, %c0_i32_1 : i32, i32, i32
  }
  func.func @transform_2(%arg0: i32) -> (i32, i32) {
    %c0_i32 = arith.constant 0 : i32
    %c0_i32_0 = arith.constant 0 : i32
    %c0_i32_1 = arith.constant 0 : i32
    return %c0_i32, %c0_i32_0 : i32, i32
  }
  func.func @transform_3(%arg0: i32) -> (i32, i32, i32) {
    %c0_i32 = arith.constant 0 : i32
    %c0_i32_0 = arith.constant 0 : i32
    %c0_i32_1 = arith.constant 0 : i32
    %c0_i32_2 = arith.constant 0 : i32
    return %c0_i32, %c0_i32_0, %c0_i32_1 : i32, i32, i32
  }
  func.func @transform_4(%arg0: i32) -> (i32, i32) {
    %c0_i32 = arith.constant 0 : i32
    %c0_i32_0 = arith.constant 0 : i32
    %c0_i32_1 = arith.constant 0 : i32
    return %c0_i32, %c0_i32_0 : i32, i32
  }
  func.func @transform_5(%arg0: i32) -> (i32, i32, i32) {
    %c0_i32 = arith.constant 0 : i32
    %c0_i32_0 = arith.constant 0 : i32
    %c0_i32_1 = arith.constant 0 : i32
    %c0_i32_2 = arith.constant 0 : i32
    return %c0_i32, %c0_i32_0, %c0_i32_1 : i32, i32, i32
  }
  func.func @transform_6(%arg0: i32) -> (i32, i32) {
    %c0_i32 = arith.constant 0 : i32
    %c0_i32_0 = arith.constant 0 : i32
    %c0_i32_1 = arith.constant 0 : i32
    return %c0_i32, %c0_i32_0 : i32, i32
  }
  func.func @transform_7(%arg0: i32) -> (i32, i32) {
    %c0_i32 = arith.constant 0 : i32
    %c0_i32_0 = arith.constant 0 : i32
    %c0_i32_1 = arith.constant 0 : i32
    return %c0_i32, %c0_i32_0 : i32, i32
  }
  func.func @transform_8(%arg0: i32) -> (i32, i32) {
    %c0_i32 = arith.constant 0 : i32
    %c0_i32_0 = arith.constant 0 : i32
    %c0_i32_1 = arith.constant 0 : i32
    return %c0_i32, %c0_i32_0 : i32, i32
  }
  func.func @transform_9(%arg0: i32) -> (i32, i32) {
    %c0_i32 = arith.constant 0 : i32
    %c0_i32_0 = arith.constant 0 : i32
    %c0_i32_1 = arith.constant 0 : i32
    return %c0_i32, %c0_i32_0 : i32, i32
  }
  func.func @transform_10(%arg0: i32) -> (i32, i32) {
    %c0_i32 = arith.constant 0 : i32
    %c0_i32_0 = arith.constant 0 : i32
    %c0_i32_1 = arith.constant 0 : i32
    return %c0_i32, %c0_i32_0 : i32, i32
  }
  func.func @transform_11(%arg0: i32) -> (i32, i32, i32) {
    %c0_i32 = arith.constant 0 : i32
    %c0_i32_0 = arith.constant 0 : i32
    %c0_i32_1 = arith.constant 0 : i32
    return %arg0, %c0_i32, %c0_i32_0 : i32, i32, i32
  }
}

</mosaic_0001>

<llo_original>
// kernel: net_forward.1
$region0: #{net_forward.1}
  #allocation0 [shape = 'u32[]', space=smem, size = 0x4, offset = 0x4, fixed_abs, tag = 'smem constant byte address 0x4 - core index']
  #allocation1 [shape = 'u32[144,128]{1,0:T(1,128)}', space=vmem, size = 0x12000, scoped, tag = 'internal scratch']
  %s0 = inlined_call_operand.vmem [shape: f32[2,4,8,96], index: 0, kind: input, shape index: {}]
  %s1 = inlined_call_operand.vmem [shape: bf16[5,96,256], index: 1, kind: input, shape index: {}]
  %s2 = inlined_call_operand.vmem [shape: f32[1,128], index: 2, kind: input, shape index: {}]
  %s3 = inlined_call_operand.vmem [shape: bf16[5,128,256], index: 3, kind: input, shape index: {}]
  %s4 = inlined_call_operand.vmem [shape: f32[1,128], index: 4, kind: input, shape index: {}]
  %s5 = inlined_call_operand.vmem [shape: bf16[5,128,128], index: 5, kind: input, shape index: {}]
  %s6 = inlined_call_operand.vmem [shape: f32[1,128], index: 6, kind: input, shape index: {}]
  %s7 = inlined_call_operand.vmem [shape: bf16[128,128], index: 7, kind: input, shape index: {}]
  %s8 = inlined_call_operand.vmem [shape: f32[1,128], index: 8, kind: input, shape index: {}]
  %s9 = inlined_call_operand.vmem [shape: bf16[128,128], index: 9, kind: input, shape index: {}]
  %s10 = inlined_call_operand.vmem [shape: f32[1,128], index: 10, kind: input, shape index: {}]
  %s11 = inlined_call_operand.hbm [shape: f32[2,1,128], index: 11, kind: output, shape index: {}]
  %s12 = sld [smem:[#allocation0]]
  $region77: #{net_forward.1} parent=0
    _
  %s14 = ssub.s32 1, %s12
  %s15 = scalar_select 0, %s14, %s12
  $region1: #{net_forward.1} parent=0
    #allocation2 [shape = 'u8[1024]{0}', space=vmem, size = 0x400, scoped, tag = 'output window, operand 0']
    #allocation3 [shape = 's32[2]{0}', space=sflag, size = 0x8, scoped, tag = 'scoped memory for net_forward.1']
    %16 = vsyncpa [#allocation3], 0
    %s17 = scalar_lea.sflag [#allocation3], 1
    %18 = vsyncpa %s17, 0
    loop: start=0, step=1, limit=4
    $region2: #{net_forward.1} parent=1 // loop_pre_header
      _
    $region3: #{net_forward.1} parent=1 // loop_header
      %s20 = sphi 0, %s24
      %p21 = scmp.ge.s32.totalorder %s20, 4
      %s30 = sphi 0, %s32
      %s33 = sphi 0, %s30
      %s34 = sphi 0, %s33
      %s50 = sphi 0, %s34
      %s54 = sphi 0, %s54
      %s56 = sphi 0, %s54
      %s57 = sphi 0, %s56
      %s71 = sphi 0, %s57
      %s75 = sphi 0, %s75
      %s77 = sphi 0, %s75
      %s78 = sphi 0, %s77
      %s92 = sphi 0, %s78
      %s96 = sphi 0, %s96
      %s98 = sphi 0, %s96
      %s99 = sphi 0, %s98
      %s113 = sphi 0, %s99
      %s117 = sphi 0, %s117
      %s119 = sphi 0, %s117
      %s120 = sphi 0, %s119
      %s134 = sphi 0, %s120
      %s138 = sphi 0, %s138
      %s140 = sphi 0, %s138
      %s141 = sphi 0, %s140
      %s155 = sphi 0, %s141
      %s159 = sphi 0, %s159
      %s161 = sphi 0, %s159
      %s162 = sphi 0, %s161
      %s176 = sphi 0, %s162
      %s180 = sphi 0, %s180
      %s182 = sphi 0, %s180
      %s183 = sphi 0, %s182
      %s197 = sphi 0, %s183
      %s201 = sphi 0, %s201
      %s203 = sphi 0, %s201
      %s204 = sphi 0, %s203
      %s218 = sphi 0, %s204
      %s222 = sphi 0, %s222
      %s224 = sphi 0, %s222
      %s225 = sphi 0, %s224
      %s239 = sphi 0, %s225
      %s243 = sphi 0, %s243
      %s245 = sphi 0, %s243
      %s246 = sphi 0, %s245
      %s260 = sphi 0, %s246
      %s266 = sphi 0, %s268
      %s269 = sphi 0, %s266
      %s270 = sphi 0, %s269
      %s286 = sphi 0, %s270
    $region4: #{net_forward.1} parent=1 // loop_header_branch
      %23 = sbr.rel (%p21) target = $region8
    $region5: #{net_forward.1} parent=1 // loop_body
      %s25 = ssub.s32 %s20, 1
      %s26 = ssub.s32 %s20, 2
      %s27 = sadd.s32 %s20, 1
      %s28 = ssub.s32 %s20, %s27
      %p29 = scmp.eq.s32.totalorder %s28, 0
      %s31 = sadd.s32 %s30, 1
      %s32 = scalar_select %p29, %s30, %s31
      %p35 = pneg %p29
      %p36 = scmp.eq.s32.totalorder %s20, 1
      %p37 = por %p35, %p36
      %p38 = scmp.ne.s32.totalorder %s30, %s33
      %p39 = scmp.eq.s32.totalorder %s20, 0
      %p40 = por %p38, %p39
      %p41 = scmp.ne.s32.totalorder %s30, %s33
      %p42 = scmp.eq.s32.totalorder %s25, 1
      %p43 = por %p41, %p42
      %p44 = scmp.ne.s32.totalorder %s33, %s34
      %p45 = scmp.eq.s32.totalorder %s25, 0
      %p46 = por %p44, %p45
      %p47 = scmp.ne.s32.totalorder %s33, %s34
      %p48 = scmp.eq.s32.totalorder %s26, 1
      %p49 = por %p47, %p48
      %p51 = scmp.ne.s32.totalorder %s34, %s50
      %p52 = scmp.eq.s32.totalorder %s26, 0
      %p53 = por %p51, %p52
      %s55 = sadd.s32 %s54, 1
      %p58 = scmp.eq.s32.totalorder %s20, 1
      %p59 = scmp.ne.s32.totalorder %s54, %s56
      %p60 = scmp.eq.s32.totalorder %s20, 0
      %p61 = por %p59, %p60
      %p62 = scmp.ne.s32.totalorder %s54, %s56
      %p63 = scmp.eq.s32.totalorder %s25, 1
      %p64 = por %p62, %p63
      %p65 = scmp.ne.s32.totalorder %s56, %s57
      %p66 = scmp.eq.s32.totalorder %s25, 0
      %p67 = por %p65, %p66
      %p68 = scmp.ne.s32.totalorder %s56, %s57
      %p69 = scmp.eq.s32.totalorder %s26, 1
      %p70 = por %p68, %p69
      %p72 = scmp.ne.s32.totalorder %s57, %s71
      %p73 = scmp.eq.s32.totalorder %s26, 0
      %p74 = por %p72, %p73
      %s76 = sadd.s32 %s75, 1
      %p79 = scmp.eq.s32.totalorder %s20, 1
      %p80 = scmp.ne.s32.totalorder %s75, %s77
      %p81 = scmp.eq.s32.totalorder %s20, 0
      %p82 = por %p80, %p81
      %p83 = scmp.ne.s32.totalorder %s75, %s77
      %p84 = scmp.eq.s32.totalorder %s25, 1
      %p85 = por %p83, %p84
      %p86 = scmp.ne.s32.totalorder %s77, %s78
      %p87 = scmp.eq.s32.totalorder %s25, 0
      %p88 = por %p86, %p87
      %p89 = scmp.ne.s32.totalorder %s77, %s78
      %p90 = scmp.eq.s32.totalorder %s26, 1
      %p91 = por %p89, %p90
      %p93 = scmp.ne.s32.totalorder %s78, %s92
      %p94 = scmp.eq.s32.totalorder %s26, 0
      %p95 = por %p93, %p94
      %s97 = sadd.s32 %s96, 1
      %p100 = scmp.eq.s32.totalorder %s20, 1
      %p101 = scmp.ne.s32.totalorder %s96, %s98
      %p102 = scmp.eq.s32.totalorder %s20, 0
      %p103 = por %p101, %p102
      %p104 = scmp.ne.s32.totalorder %s96, %s98
      %p105 = scmp.eq.s32.totalorder %s25, 1
      %p106 = por %p104, %p105
      %p107 = scmp.ne.s32.totalorder %s98, %s99
      %p108 = scmp.eq.s32.totalorder %s25, 0
      %p109 = por %p107, %p108
      %p110 = scmp.ne.s32.totalorder %s98, %s99
      %p111 = scmp.eq.s32.totalorder %s26, 1
      %p112 = por %p110, %p111
      %p114 = scmp.ne.s32.totalorder %s99, %s113
      %p115 = scmp.eq.s32.totalorder %s26, 0
      %p116 = por %p114, %p115
      %s118 = sadd.s32 %s117, 1
      %p121 = scmp.eq.s32.totalorder %s20, 1
      %p122 = scmp.ne.s32.totalorder %s117, %s119
      %p123 = scmp.eq.s32.totalorder %s20, 0
      %p124 = por %p122, %p123
      %p125 = scmp.ne.s32.totalorder %s117, %s119
      %p126 = scmp.eq.s32.totalorder %s25, 1
      %p127 = por %p125, %p126
      %p128 = scmp.ne.s32.totalorder %s119, %s120
      %p129 = scmp.eq.s32.totalorder %s25, 0
      %p130 = por %p128, %p129
      %p131 = scmp.ne.s32.totalorder %s119, %s120
      %p132 = scmp.eq.s32.totalorder %s26, 1
      %p133 = por %p131, %p132
      %p135 = scmp.ne.s32.totalorder %s120, %s134
      %p136 = scmp.eq.s32.totalorder %s26, 0
      %p137 = por %p135, %p136
      %s139 = sadd.s32 %s138, 1
      %p142 = scmp.eq.s32.totalorder %s20, 1
      %p143 = scmp.ne.s32.totalorder %s138, %s140
      %p144 = scmp.eq.s32.totalorder %s20, 0
      %p145 = por %p143, %p144
      %p146 = scmp.ne.s32.totalorder %s138, %s140
      %p147 = scmp.eq.s32.totalorder %s25, 1
      %p148 = por %p146, %p147
      %p149 = scmp.ne.s32.totalorder %s140, %s141
      %p150 = scmp.eq.s32.totalorder %s25, 0
      %p151 = por %p149, %p150
      %p152 = scmp.ne.s32.totalorder %s140, %s141
      %p153 = scmp.eq.s32.totalorder %s26, 1
      %p154 = por %p152, %p153
      %p156 = scmp.ne.s32.totalorder %s141, %s155
      %p157 = scmp.eq.s32.totalorder %s26, 0
      %p158 = por %p156, %p157
      %s160 = sadd.s32 %s159, 1
      %p163 = scmp.eq.s32.totalorder %s20, 1
      %p164 = scmp.ne.s32.totalorder %s159, %s161
      %p165 = scmp.eq.s32.totalorder %s20, 0
      %p166 = por %p164, %p165
      %p167 = scmp.ne.s32.totalorder %s159, %s161
      %p168 = scmp.eq.s32.totalorder %s25, 1
      %p169 = por %p167, %p168
      %p170 = scmp.ne.s32.totalorder %s161, %s162
      %p171 = scmp.eq.s32.totalorder %s25, 0
      %p172 = por %p170, %p171
      %p173 = scmp.ne.s32.totalorder %s161, %s162
      %p174 = scmp.eq.s32.totalorder %s26, 1
      %p175 = por %p173, %p174
      %p177 = scmp.ne.s32.totalorder %s162, %s176
      %p178 = scmp.eq.s32.totalorder %s26, 0
      %p179 = por %p177, %p178
      %s181 = sadd.s32 %s180, 1
      %p184 = scmp.eq.s32.totalorder %s20, 1
      %p185 = scmp.ne.s32.totalorder %s180, %s182
      %p186 = scmp.eq.s32.totalorder %s20, 0
      %p187 = por %p185, %p186
      %p188 = scmp.ne.s32.totalorder %s180, %s182
      %p189 = scmp.eq.s32.totalorder %s25, 1
      %p190 = por %p188, %p189
      %p191 = scmp.ne.s32.totalorder %s182, %s183
      %p192 = scmp.eq.s32.totalorder %s25, 0
      %p193 = por %p191, %p192
      %p194 = scmp.ne.s32.totalorder %s182, %s183
      %p195 = scmp.eq.s32.totalorder %s26, 1
      %p196 = por %p194, %p195
      %p198 = scmp.ne.s32.totalorder %s183, %s197
      %p199 = scmp.eq.s32.totalorder %s26, 0
      %p200 = por %p198, %p199
      %s202 = sadd.s32 %s201, 1
      %p205 = scmp.eq.s32.totalorder %s20, 1
      %p206 = scmp.ne.s32.totalorder %s201, %s203
      %p207 = scmp.eq.s32.totalorder %s20, 0
      %p208 = por %p206, %p207
      %p209 = scmp.ne.s32.totalorder %s201, %s203
      %p210 = scmp.eq.s32.totalorder %s25, 1
      %p211 = por %p209, %p210
      %p212 = scmp.ne.s32.totalorder %s203, %s204
      %p213 = scmp.eq.s32.totalorder %s25, 0
      %p214 = por %p212, %p213
      %p215 = scmp.ne.s32.totalorder %s203, %s204
      %p216 = scmp.eq.s32.totalorder %s26, 1
      %p217 = por %p215, %p216
      %p219 = scmp.ne.s32.totalorder %s204, %s218
      %p220 = scmp.eq.s32.totalorder %s26, 0
      %p221 = por %p219, %p220
      %s223 = sadd.s32 %s222, 1
      %p226 = scmp.eq.s32.totalorder %s20, 1
      %p227 = scmp.ne.s32.totalorder %s222, %s224
      %p228 = scmp.eq.s32.totalorder %s20, 0
      %p229 = por %p227, %p228
      %p230 = scmp.ne.s32.totalorder %s222, %s224
      %p231 = scmp.eq.s32.totalorder %s25, 1
      %p232 = por %p230, %p231
      %p233 = scmp.ne.s32.totalorder %s224, %s225
      %p234 = scmp.eq.s32.totalorder %s25, 0
      %p235 = por %p233, %p234
      %p236 = scmp.ne.s32.totalorder %s224, %s225
      %p237 = scmp.eq.s32.totalorder %s26, 1
      %p238 = por %p236, %p237
      %p240 = scmp.ne.s32.totalorder %s225, %s239
      %p241 = scmp.eq.s32.totalorder %s26, 0
      %p242 = por %p240, %p241
      %s244 = sadd.s32 %s243, 1
      %p247 = scmp.eq.s32.totalorder %s20, 1
      %p248 = scmp.ne.s32.totalorder %s243, %s245
      %p249 = scmp.eq.s32.totalorder %s20, 0
      %p250 = por %p248, %p249
      %p251 = scmp.ne.s32.totalorder %s243, %s245
      %p252 = scmp.eq.s32.totalorder %s25, 1
      %p253 = por %p251, %p252
      %p254 = scmp.ne.s32.totalorder %s245, %s246
      %p255 = scmp.eq.s32.totalorder %s25, 0
      %p256 = por %p254, %p255
      %p257 = scmp.ne.s32.totalorder %s245, %s246
      %p258 = scmp.eq.s32.totalorder %s26, 1
      %p259 = por %p257, %p258
      %p261 = scmp.ne.s32.totalorder %s246, %s260
      %p262 = scmp.eq.s32.totalorder %s26, 0
      %p263 = por %p261, %p262
      %s264 = ssub.s32 %s20, %s27
      %p265 = scmp.eq.s32.totalorder %s264, 0
      %s267 = sadd.s32 %s266, 1
      %s268 = scalar_select %p265, %s266, %s267
      %p271 = pneg %p265
      %p272 = scmp.eq.s32.totalorder %s20, 1
      %p273 = por %p271, %p272
      %p274 = scmp.ne.s32.totalorder %s266, %s269
      %p275 = scmp.eq.s32.totalorder %s20, 0
      %p276 = por %p274, %p275
      %p277 = scmp.ne.s32.totalorder %s266, %s269
      %p278 = scmp.eq.s32.totalorder %s25, 1
      %p279 = por %p277, %p278
      %p280 = scmp.ne.s32.totalorder %s269, %s270
      %p281 = scmp.eq.s32.totalorder %s25, 0
      %p282 = por %p280, %p281
      %p283 = scmp.ne.s32.totalorder %s269, %s270
      %p284 = scmp.eq.s32.totalorder %s26, 1
      %p285 = por %p283, %p284
      %p287 = scmp.ne.s32.totalorder %s270, %s286
      %p288 = scmp.eq.s32.totalorder %s26, 0
      %p289 = por %p287, %p288
      %p290 = scmp.le.s32.totalorder 1, %s20
      %p291 = scmp.lt.s32.totalorder %s20, 3
      %p292 = pnand %p290, %p291
      %p293 = pneg %p292
      // Predicated region
      $region9: #{net_forward.1} parent=5 // pred_check
        _
      $region10: #{net_forward.1} parent=5 // pred_check_branch
        %295 = sbr.rel (%p292) target = $region12
      $region11: #{net_forward.1} parent=5 // pred_region
        %s296 = ssub.s32 %s20, 1
        // Predicated region
        $region13: #{net_forward.1} parent=11 // pred_check
          %p297 = pneg %p67
        $region14: #{net_forward.1} parent=11 // pred_check_branch
          %299 = sbr.rel (%p297) target = $region16
        $region15: #{net_forward.1} parent=11 // pred_region
          _
        $region16: #{net_forward.1} parent=11 // pred_fallthru
          _
        // Predicated region
        $region17: #{net_forward.1} parent=11 // pred_check
          %p300 = pneg %p88
        $region18: #{net_forward.1} parent=11 // pred_check_branch
          %302 = sbr.rel (%p300) target = $region20
        $region19: #{net_forward.1} parent=11 // pred_region
          _
        $region20: #{net_forward.1} parent=11 // pred_fallthru
          _
        // Predicated region
        $region21: #{net_forward.1} parent=11 // pred_check
          %p303 = pneg %p109
        $region22: #{net_forward.1} parent=11 // pred_check_branch
          %305 = sbr.rel (%p303) target = $region24
        $region23: #{net_forward.1} parent=11 // pred_region
          _
        $region24: #{net_forward.1} parent=11 // pred_fallthru
          _
        // Predicated region
        $region25: #{net_forward.1} parent=11 // pred_check
          %p306 = pneg %p130
        $region26: #{net_forward.1} parent=11 // pred_check_branch
          %308 = sbr.rel (%p306) target = $region28
        $region27: #{net_forward.1} parent=11 // pred_region
          _
        $region28: #{net_forward.1} parent=11 // pred_fallthru
          _
        // Predicated region
        $region29: #{net_forward.1} parent=11 // pred_check
          %p309 = pneg %p151
        $region30: #{net_forward.1} parent=11 // pred_check_branch
          %311 = sbr.rel (%p309) target = $region32
        $region31: #{net_forward.1} parent=11 // pred_region
          _
        $region32: #{net_forward.1} parent=11 // pred_fallthru
          _
        // Predicated region
        $region33: #{net_forward.1} parent=11 // pred_check
          %p312 = pneg %p172
        $region34: #{net_forward.1} parent=11 // pred_check_branch
          %314 = sbr.rel (%p312) target = $region36
        $region35: #{net_forward.1} parent=11 // pred_region
          _
        $region36: #{net_forward.1} parent=11 // pred_fallthru
          _
        // Predicated region
        $region37: #{net_forward.1} parent=11 // pred_check
          %p315 = pneg %p193
        $region38: #{net_forward.1} parent=11 // pred_check_branch
          %317 = sbr.rel (%p315) target = $region40
        $region39: #{net_forward.1} parent=11 // pred_region
          _
        $region40: #{net_forward.1} parent=11 // pred_fallthru
          _
        // Predicated region
        $region41: #{net_forward.1} parent=11 // pred_check
          %p318 = pneg %p214
        $region42: #{net_forward.1} parent=11 // pred_check_branch
          %320 = sbr.rel (%p318) target = $region44
        $region43: #{net_forward.1} parent=11 // pred_region
          _
        $region44: #{net_forward.1} parent=11 // pred_fallthru
          _
        // Predicated region
        $region45: #{net_forward.1} parent=11 // pred_check
          %p321 = pneg %p235
        $region46: #{net_forward.1} parent=11 // pred_check_branch
          %323 = sbr.rel (%p321) target = $region48
        $region47: #{net_forward.1} parent=11 // pred_region
          _
        $region48: #{net_forward.1} parent=11 // pred_fallthru
          _
        // Predicated region
        $region49: #{net_forward.1} parent=11 // pred_check
          %p324 = pneg %p256
        $region50: #{net_forward.1} parent=11 // pred_check_branch
          %326 = sbr.rel (%p324) target = $region52
        $region51: #{net_forward.1} parent=11 // pred_region
          _
        $region52: #{net_forward.1} parent=11 // pred_fallthru
          _
      $region12: #{net_forward.1} parent=5 // pred_fallthru
        _
      %p327 = scmp.lt.s32.totalorder %s20, 2
      // Predicated region
      $region53: #{net_forward.1} parent=5 // pred_check
        %p328 = pneg %p327
      $region54: #{net_forward.1} parent=5 // pred_check_branch
        %330 = sbr.rel (%p328) target = $region56
      $region55: #{net_forward.1} parent=5 // pred_region
        // Predicated region
        $region57: #{net_forward.1} parent=55 // pred_check
          %p331 = pneg %p40
        $region58: #{net_forward.1} parent=55 // pred_check_branch
          %333 = sbr.rel (%p331) target = $region60
        $region59: #{net_forward.1} parent=55 // pred_region
          %p334 = scmp.lt.s32.totalorder %s20, 1
          %s335 = scalar_select %p334, %s20, 1
          %s336 = smul.addr %s335, 4
          %s337 = smul.addr %s336, 8
          %s338 = scalar_lea.vmem %s0, %s337
        $region60: #{net_forward.1} parent=55 // pred_fallthru
          _
      $region56: #{net_forward.1} parent=5 // pred_fallthru
        _
      %p339 = scmp.le.s32.totalorder 1, %s20
      %p340 = scmp.lt.s32.totalorder %s20, 3
      %p341 = pnand %p339, %p340
      %p342 = pneg %p341
      // Predicated region
      $region61: #{net_forward.1} parent=5 // pred_check
        _
      $region62: #{net_forward.1} parent=5 // pred_check_branch
        %344 = sbr.rel (%p341) target = $region64
      $region63: #{net_forward.1} parent=5 // pred_region
        %s345 = ssub.s32 %s20, 1
        %p346 = scmp.lt.s32.totalorder %s25, 1
        %s347 = scalar_select %p346, %s25, 1
        %s348 = smul.addr %s347, 4
        %s349 = smul.addr %s348, 8
        %s350 = scalar_lea.vmem %s0, %s349
        %p351 = pneg %p46
        %p352 = pneg %p43
        %p353 = pneg %p67
        %p354 = pneg %p64
        %p355 = pneg %p88
        %p356 = pneg %p85
        %p357 = pneg %p109
        %p358 = pneg %p106
        %p359 = pneg %p130
        %p360 = pneg %p127
        %p361 = pneg %p151
        %p362 = pneg %p148
        %p363 = pneg %p172
        %p364 = pneg %p169
        %p365 = pneg %p193
        %p366 = pneg %p190
        %p367 = pneg %p214
        %p368 = pneg %p211
        %p369 = pneg %p235
        %p370 = pneg %p232
        %p371 = pneg %p256
        %p372 = pneg %p253
        %p373 = pneg %p282
        %p374 = pneg %p279
        %s375 = sand.u32 %s269, 1
        %s376 = scalar_lea.sflag [#allocation3], %s375
        %s377 = sand.u32 %s269, 1
        %s378 = scalar_lea.vmem [#allocation2], %s377
        %p379 = scmp.lt.s32.totalorder %s25, 1
        %s380 = scalar_select %p379, %s25, 1
        %s381 = smul.addr %s380, 4
        %s382 = smul.addr %s381, 8
        %s383 = scalar_lea.vmem %s0, %s382
        %v385 = vld [vmem:[%s2] sm:$0x1]
        %v386 = vld [vmem:[%s4] sm:$0x1]
        %v387 = vld [vmem:[%s383] sm:$0x7f]
        %s388 = scalar_lea.vmem %s383, 8
        %v389 = vld [vmem:[%s388] sm:$0x7f]
        %s390 = scalar_lea.vmem %s383, 16
        %v391 = vld [vmem:[%s390] sm:$0x7f]
        %s392 = scalar_lea.vmem %s383, 24
        %v393 = vld [vmem:[%s392] sm:$0x7f]
        %v395 = vrot.slane %v389, 1
        %v398 = vrot.slane %v391, 2
        %v401 = vrot.slane %v393, 3
        %vm403 = vcmask 1046528
        %v404 = vsel %vm403, %v387, %v395
        %vm405 = vcmask 1045504
        %v406 = vsel %vm405, %v395, %v398
        %vm407 = vcmask 1044480
        %v408 = vsel %vm407, %v398, %v401
        %v409 = vpack.c.bf16 %v406, %v404
        %v410 = vpack.c.bf16 %v401, %v408
        %v411 = vld [vmem:[%s1] sm:$0xff]
        %v412 = vld [vmem:[%s1 + $0x8] sm:$0xff]
        %v413 = vld [vmem:[%s1 + $0x10] sm:$0xff]
        %v414 = vld [vmem:[%s1 + $0x18] sm:$0xff]
        %v415 = vld [vmem:[%s1 + $0x20] sm:$0xff]
        %v416 = vld [vmem:[%s1 + $0x28] sm:$0xff]
        %v417 = vld [vmem:[%s1 + $0x30] sm:$0xff]
        %v418 = vld [vmem:[%s1 + $0x38] sm:$0xff]
        %v419 = vld [vmem:[%s1 + $0x40] sm:$0xff]
        %v420 = vld [vmem:[%s1 + $0x48] sm:$0xff]
        %v421 = vld [vmem:[%s1 + $0x50] sm:$0xff]
        %v422 = vld [vmem:[%s1 + $0x58] sm:$0xff]
        %v423 = vld [vmem:[%s383 + $0x1] sm:$0x7f]
        %v424 = vrot.slane %v391, 1
        %v426 = vrot.slane %v393, 2
        %v429 = vrot.slane %v423, 3
        %v431 = vsel %vm403, %v389, %v424
        %v432 = vsel %vm405, %v424, %v426
        %v433 = vsel %vm407, %v426, %v429
        %v434 = vpack.c.bf16 %v432, %v431
        %v435 = vpack.c.bf16 %v429, %v433
        %s436 = scalar_lea.vmem %s1, 96
        %v437 = vld [vmem:[%s436] sm:$0xff]
        %v438 = vld [vmem:[%s436 + $0x8] sm:$0xff]
        %v439 = vld [vmem:[%s436 + $0x10] sm:$0xff]
        %v440 = vld [vmem:[%s436 + $0x18] sm:$0xff]
        %v441 = vld [vmem:[%s436 + $0x20] sm:$0xff]
        %v442 = vld [vmem:[%s436 + $0x28] sm:$0xff]
        %v443 = vld [vmem:[%s436 + $0x30] sm:$0xff]
        %v444 = vld [vmem:[%s436 + $0x38] sm:$0xff]
        %v445 = vld [vmem:[%s436 + $0x40] sm:$0xff]
        %v446 = vld [vmem:[%s436 + $0x48] sm:$0xff]
        %v447 = vld [vmem:[%s436 + $0x50] sm:$0xff]
        %v448 = vld [vmem:[%s436 + $0x58] sm:$0xff]
        %v461 = vunpack.c.l.b16 %v437
        %v462 = vunpack.c.h.b16 %v437
        %v463 = vunpack.c.l.b16 %v438
        %v464 = vunpack.c.h.b16 %v438
        %v465 = vunpack.c.l.b16 %v439
        %v466 = vunpack.c.h.b16 %v439
        %v467 = vunpack.c.l.b16 %v440
        %v468 = vunpack.c.h.b16 %v440
        %v469 = vunpack.c.l.b16 %v441
        %v470 = vunpack.c.h.b16 %v441
        %v471 = vunpack.c.l.b16 %v442
        %v472 = vunpack.c.h.b16 %v442
        %v473 = vunpack.c.l.b16 %v443
        %v474 = vunpack.c.h.b16 %v443
        %v475 = vunpack.c.l.b16 %v444
        %v476 = vunpack.c.h.b16 %v444
        %v477 = vunpack.c.l.b16 %v445
        %v478 = vunpack.c.h.b16 %v445
        %v479 = vunpack.c.l.b16 %v446
        %v480 = vunpack.c.h.b16 %v446
        %v481 = vunpack.c.l.b16 %v447
        %v482 = vunpack.c.h.b16 %v447
        %v483 = vunpack.c.l.b16 %v448
        %v484 = vunpack.c.h.b16 %v448
        %v485 = vpack.c.b16 %v463, %v461
        %v486 = vpack.c.b16 %v464, %v462
        %v487 = vpack.c.b16 %v467, %v465
        %v488 = vpack.c.b16 %v468, %v466
        %v489 = vpack.c.b16 %v471, %v469
        %v490 = vpack.c.b16 %v472, %v470
        %v491 = vpack.c.b16 %v475, %v473
        %v492 = vpack.c.b16 %v476, %v474
        %v493 = vpack.c.b16 %v479, %v477
        %v494 = vpack.c.b16 %v480, %v478
        %v495 = vpack.c.b16 %v483, %v481
        %v496 = vpack.c.b16 %v484, %v482
        %vm509 = vcmask 785408
        %v511 = vsel %vm509, %v434, 0
        %v514 = vsel %vm509, %v435, 0
        %516 = vmatprep.subr.bf16.mxu0 %v486
        %517 = vmatpush1.bf16.msra.mxu0 %v485
        %518 = vmatprep.subr.bf16.mxu0 %v488
        %519 = vmatpush1.bf16.msra.mxu0 %v487
        %520 = vmatprep.subr.bf16.mxu0 %v490
        %521 = vmatpush1.bf16.msra.mxu0 %v489
        %522 = vmatprep.subr.bf16.mxu0 %v492
        %523 = vmatpush1.bf16.msra.mxu0 %v491
        %524 = vmatprep.subr.bf16.mxu0 %v494
        %525 = vmatpush1.bf16.msra.mxu0 %v493
        %526 = vmatprep.subr.bf16.mxu0 %v496
        %527 = vmatpush1.bf16.msra.mxu0 %v495
        %528 = vmatprep.subr.bf16.mxu0 0
        %529 = vmatpush1.bf16.msra.mxu0 0
        %530 = vmatprep.subr.bf16.mxu0 0
        %531 = vmatpush1.bf16.msra.mxu0 0
        %532 = vmatprep.subr.bf16.mxu0 0
        %533 = vmatpush1.bf16.msra.mxu0 0
        %534 = vmatprep.subr.bf16.mxu0 0
        %535 = vmatpush1.bf16.msra.mxu0 0
        %536 = vmatprep.subr.bf16.mxu0 0
        %537 = vmatpush1.bf16.msra.mxu0 0
        %538 = vmatprep.subr.bf16.mxu0 0
        %539 = vmatpush1.bf16.msra.mxu0 0
        %540 = vmatprep.subr.bf16.mxu0 0
        %541 = vmatpush1.bf16.msra.mxu0 0
        %542 = vmatprep.subr.bf16.mxu0 0
        %543 = vmatpush1.bf16.msra.mxu0 0
        %544 = vmatprep.subr.bf16.mxu0 0
        %545 = vmatpush1.bf16.msra.mxu0 0
        %546 = vmatprep.subr.bf16.mxu0 0
        %547 = vmatpush1.bf16.msra.mxu0 0
        %548 = vmatprep.mubr.bf16.mxu0 0
        %549 = vmatmul.mubr.bf16.gmra.mrb[0].mxu0 %v511
        %v550 = vpop.f32.mrb[0].mxu0
        %v551 = vadd.f32 0.0, %v550
        %v552 = vpop.f32.mrb[0].mxu0
        %v553 = vadd.f32 0.0, %v552
        %v554 = vpop.f32.mrb[0].mxu0
        %v555 = vadd.f32 0.0, %v554
        %v556 = vpop.f32.mrb[0].mxu0
        %v557 = vadd.f32 0.0, %v556
        %558 = vmatprep.mubr.bf16.mxu0 0
        %559 = vmatmul.mubr.bf16.gmra.mrb[0].mxu0 %v514
        %v560 = vpop.f32.mrb[0].mxu0
        %v561 = vadd.f32 0.0, %v560
        %v562 = vpop.f32.mrb[0].mxu0
        %v563 = vadd.f32 0.0, %v562
        %v564 = vpop.f32.mrb[0].mxu0
        %v565 = vadd.f32 0.0, %v564
        %v566 = vpop.f32.mrb[0].mxu0
        %v567 = vadd.f32 0.0, %v566
        %568 = vdwg.mxu0
        %v581 = vunpack.c.l.b16 %v411
        %v582 = vunpack.c.h.b16 %v411
        %v583 = vunpack.c.l.b16 %v412
        %v584 = vunpack.c.h.b16 %v412
        %v585 = vunpack.c.l.b16 %v413
        %v586 = vunpack.c.h.b16 %v413
        %v587 = vunpack.c.l.b16 %v414
        %v588 = vunpack.c.h.b16 %v414
        %v589 = vunpack.c.l.b16 %v415
        %v590 = vunpack.c.h.b16 %v415
        %v591 = vunpack.c.l.b16 %v416
        %v592 = vunpack.c.h.b16 %v416
        %v593 = vunpack.c.l.b16 %v417
        %v594 = vunpack.c.h.b16 %v417
        %v595 = vunpack.c.l.b16 %v418
        %v596 = vunpack.c.h.b16 %v418
        %v597 = vunpack.c.l.b16 %v419
        %v598 = vunpack.c.h.b16 %v419
        %v599 = vunpack.c.l.b16 %v420
        %v600 = vunpack.c.h.b16 %v420
        %v601 = vunpack.c.l.b16 %v421
        %v602 = vunpack.c.h.b16 %v421
        %v603 = vunpack.c.l.b16 %v422
        %v604 = vunpack.c.h.b16 %v422
        %v605 = vpack.c.b16 %v583, %v581
        %v606 = vpack.c.b16 %v584, %v582
        %v607 = vpack.c.b16 %v587, %v585
        %v608 = vpack.c.b16 %v588, %v586
        %v609 = vpack.c.b16 %v591, %v589
        %v610 = vpack.c.b16 %v592, %v590
        %v611 = vpack.c.b16 %v595, %v593
        %v612 = vpack.c.b16 %v596, %v594
        %v613 = vpack.c.b16 %v599, %v597
        %v614 = vpack.c.b16 %v600, %v598
        %v615 = vpack.c.b16 %v603, %v601
        %v616 = vpack.c.b16 %v604, %v602
        %v630 = vsel %vm509, %v409, 0
        %v633 = vsel %vm509, %v410, 0
        %635 = vmatprep.subr.bf16.mxu0 %v606
        %636 = vmatpush1.bf16.msra.mxu0 %v605
        %637 = vmatprep.subr.bf16.mxu0 %v608
        %638 = vmatpush1.bf16.msra.mxu0 %v607
        %639 = vmatprep.subr.bf16.mxu0 %v610
        %640 = vmatpush1.bf16.msra.mxu0 %v609
        %641 = vmatprep.subr.bf16.mxu0 %v612
        %642 = vmatpush1.bf16.msra.mxu0 %v611
        %643 = vmatprep.subr.bf16.mxu0 %v614
        %644 = vmatpush1.bf16.msra.mxu0 %v613
        %645 = vmatprep.subr.bf16.mxu0 %v616
        %646 = vmatpush1.bf16.msra.mxu0 %v615
        %647 = vmatprep.subr.bf16.mxu0 0
        %648 = vmatpush1.bf16.msra.mxu0 0
        %649 = vmatprep.subr.bf16.mxu0 0
        %650 = vmatpush1.bf16.msra.mxu0 0
        %651 = vmatprep.subr.bf16.mxu0 0
        %652 = vmatpush1.bf16.msra.mxu0 0
        %653 = vmatprep.subr.bf16.mxu0 0
        %654 = vmatpush1.bf16.msra.mxu0 0
        %655 = vmatprep.subr.bf16.mxu0 0
        %656 = vmatpush1.bf16.msra.mxu0 0
        %657 = vmatprep.subr.bf16.mxu0 0
        %658 = vmatpush1.bf16.msra.mxu0 0
        %659 = vmatprep.subr.bf16.mxu0 0
        %660 = vmatpush1.bf16.msra.mxu0 0
        %661 = vmatprep.subr.bf16.mxu0 0
        %662 = vmatpush1.bf16.msra.mxu0 0
        %663 = vmatprep.subr.bf16.mxu0 0
        %664 = vmatpush1.bf16.msra.mxu0 0
        %665 = vmatprep.subr.bf16.mxu0 0
        %666 = vmatpush1.bf16.msra.mxu0 0
        %667 = vmatprep.mubr.bf16.mxu0 0
        %668 = vmatmul.mubr.bf16.gmra.mrb[0].mxu0 %v630
        %v669 = vpop.f32.mrb[0].mxu0
        %v670 = vadd.f32 %v551, %v669
        %v671 = vpop.f32.mrb[0].mxu0
        %v672 = vadd.f32 %v553, %v671
        %v673 = vpop.f32.mrb[0].mxu0
        %v674 = vadd.f32 %v555, %v673
        %v675 = vpop.f32.mrb[0].mxu0
        %v676 = vadd.f32 %v557, %v675
        %677 = vmatprep.mubr.bf16.mxu0 0
        %678 = vmatmul.mubr.bf16.gmra.mrb[0].mxu0 %v633
        %v679 = vpop.f32.mrb[0].mxu0
        %v680 = vadd.f32 %v561, %v679
        %v681 = vpop.f32.mrb[0].mxu0
        %v682 = vadd.f32 %v563, %v681
        %v683 = vpop.f32.mrb[0].mxu0
        %v684 = vadd.f32 %v565, %v683
        %v685 = vpop.f32.mrb[0].mxu0
        %v686 = vadd.f32 %v567, %v685
        %687 = vdwg.mxu0
        %v688 = vld [vmem:[%s388 + $0x1] sm:$0x7f]
        %v689 = vrot.slane %v393, 1
        %v691 = vrot.slane %v423, 2
        %v694 = vrot.slane %v688, 3
        %v696 = vsel %vm403, %v391, %v689
        %v697 = vsel %vm405, %v689, %v691
        %v698 = vsel %vm407, %v691, %v694
        %v699 = vpack.c.bf16 %v697, %v696
        %v700 = vpack.c.bf16 %v694, %v698
        %s701 = scalar_lea.vmem %s1, 192
        %v702 = vld [vmem:[%s701] sm:$0xff]
        %v703 = vld [vmem:[%s701 + $0x8] sm:$0xff]
        %v704 = vld [vmem:[%s701 + $0x10] sm:$0xff]
        %v705 = vld [vmem:[%s701 + $0x18] sm:$0xff]
        %v706 = vld [vmem:[%s701 + $0x20] sm:$0xff]
        %v707 = vld [vmem:[%s701 + $0x28] sm:$0xff]
        %v708 = vld [vmem:[%s701 + $0x30] sm:$0xff]
        %v709 = vld [vmem:[%s701 + $0x38] sm:$0xff]
        %v710 = vld [vmem:[%s701 + $0x40] sm:$0xff]
        %v711 = vld [vmem:[%s701 + $0x48] sm:$0xff]
        %v712 = vld [vmem:[%s701 + $0x50] sm:$0xff]
        %v713 = vld [vmem:[%s701 + $0x58] sm:$0xff]
        %v726 = vunpack.c.l.b16 %v702
        %v727 = vunpack.c.h.b16 %v702
        %v728 = vunpack.c.l.b16 %v703
        %v729 = vunpack.c.h.b16 %v703
        %v730 = vunpack.c.l.b16 %v704
        %v731 = vunpack.c.h.b16 %v704
        %v732 = vunpack.c.l.b16 %v705
        %v733 = vunpack.c.h.b16 %v705
        %v734 = vunpack.c.l.b16 %v706
        %v735 = vunpack.c.h.b16 %v706
        %v736 = vunpack.c.l.b16 %v707
        %v737 = vunpack.c.h.b16 %v707
        %v738 = vunpack.c.l.b16 %v708
        %v739 = vunpack.c.h.b16 %v708
        %v740 = vunpack.c.l.b16 %v709
        %v741 = vunpack.c.h.b16 %v709
        %v742 = vunpack.c.l.b16 %v710
        %v743 = vunpack.c.h.b16 %v710
        %v744 = vunpack.c.l.b16 %v711
        %v745 = vunpack.c.h.b16 %v711
        %v746 = vunpack.c.l.b16 %v712
        %v747 = vunpack.c.h.b16 %v712
        %v748 = vunpack.c.l.b16 %v713
        %v749 = vunpack.c.h.b16 %v713
        %v750 = vpack.c.b16 %v728, %v726
        %v751 = vpack.c.b16 %v729, %v727
        %v752 = vpack.c.b16 %v732, %v730
        %v753 = vpack.c.b16 %v733, %v731
        %v754 = vpack.c.b16 %v736, %v734
        %v755 = vpack.c.b16 %v737, %v735
        %v756 = vpack.c.b16 %v740, %v738
        %v757 = vpack.c.b16 %v741, %v739
        %v758 = vpack.c.b16 %v744, %v742
        %v759 = vpack.c.b16 %v745, %v743
        %v760 = vpack.c.b16 %v748, %v746
        %v761 = vpack.c.b16 %v749, %v747
        %v775 = vsel %vm509, %v699, 0
        %v778 = vsel %vm509, %v700, 0
        %780 = vmatprep.subr.bf16.mxu0 %v751
        %781 = vmatpush1.bf16.msra.mxu0 %v750
        %782 = vmatprep.subr.bf16.mxu0 %v753
        %783 = vmatpush1.bf16.msra.mxu0 %v752
        %784 = vmatprep.subr.bf16.mxu0 %v755
        %785 = vmatpush1.bf16.msra.mxu0 %v754
        %786 = vmatprep.subr.bf16.mxu0 %v757
        %787 = vmatpush1.bf16.msra.mxu0 %v756
        %788 = vmatprep.subr.bf16.mxu0 %v759
        %789 = vmatpush1.bf16.msra.mxu0 %v758
        %790 = vmatprep.subr.bf16.mxu0 %v761
        %791 = vmatpush1.bf16.msra.mxu0 %v760
        %792 = vmatprep.subr.bf16.mxu0 0
        %793 = vmatpush1.bf16.msra.mxu0 0
        %794 = vmatprep.subr.bf16.mxu0 0
        %795 = vmatpush1.bf16.msra.mxu0 0
        %796 = vmatprep.subr.bf16.mxu0 0
        %797 = vmatpush1.bf16.msra.mxu0 0
        %798 = vmatprep.subr.bf16.mxu0 0
        %799 = vmatpush1.bf16.msra.mxu0 0
        %800 = vmatprep.subr.bf16.mxu0 0
        %801 = vmatpush1.bf16.msra.mxu0 0
        %802 = vmatprep.subr.bf16.mxu0 0
        %803 = vmatpush1.bf16.msra.mxu0 0
        %804 = vmatprep.subr.bf16.mxu0 0
        %805 = vmatpush1.bf16.msra.mxu0 0
        %806 = vmatprep.subr.bf16.mxu0 0
        %807 = vmatpush1.bf16.msra.mxu0 0
        %808 = vmatprep.subr.bf16.mxu0 0
        %809 = vmatpush1.bf16.msra.mxu0 0
        %810 = vmatprep.subr.bf16.mxu0 0
        %811 = vmatpush1.bf16.msra.mxu0 0
        %812 = vmatprep.mubr.bf16.mxu0 0
        %813 = vmatmul.mubr.bf16.gmra.mrb[0].mxu0 %v775
        %v814 = vpop.f32.mrb[0].mxu0
        %v815 = vadd.f32 0.0, %v814
        %v816 = vpop.f32.mrb[0].mxu0
        %v817 = vadd.f32 0.0, %v816
        %v818 = vpop.f32.mrb[0].mxu0
        %v819 = vadd.f32 0.0, %v818
        %v820 = vpop.f32.mrb[0].mxu0
        %v821 = vadd.f32 0.0, %v820
        %822 = vmatprep.mubr.bf16.mxu0 0
        %823 = vmatmul.mubr.bf16.gmra.mrb[0].mxu0 %v778
        %v824 = vpop.f32.mrb[0].mxu0
        %v825 = vadd.f32 0.0, %v824
        %v826 = vpop.f32.mrb[0].mxu0
        %v827 = vadd.f32 0.0, %v826
        %v828 = vpop.f32.mrb[0].mxu0
        %v829 = vadd.f32 0.0, %v828
        %v830 = vpop.f32.mrb[0].mxu0
        %v831 = vadd.f32 0.0, %v830
        %832 = vdwg.mxu0
        %v833 = vadd.f32 %v670, %v815
        %v834 = vadd.f32 %v672, %v817
        %v835 = vadd.f32 %v674, %v819
        %v836 = vadd.f32 %v676, %v821
        %v837 = vadd.f32 %v680, %v825
        %v838 = vadd.f32 %v682, %v827
        %v839 = vadd.f32 %v684, %v829
        %v840 = vadd.f32 %v686, %v831
        %v841 = vld [vmem:[%s390 + $0x1] sm:$0x7f]
        %v842 = vrot.slane %v423, 1
        %v844 = vrot.slane %v688, 2
        %v847 = vrot.slane %v841, 3
        %v849 = vsel %vm403, %v393, %v842
        %v850 = vsel %vm405, %v842, %v844
        %v851 = vsel %vm407, %v844, %v847
        %v852 = vpack.c.bf16 %v850, %v849
        %v853 = vpack.c.bf16 %v847, %v851
        %s854 = scalar_lea.vmem %s1, 288
        %v855 = vld [vmem:[%s854] sm:$0xff]
        %v856 = vld [vmem:[%s854 + $0x8] sm:$0xff]
        %v857 = vld [vmem:[%s854 + $0x10] sm:$0xff]
        %v858 = vld [vmem:[%s854 + $0x18] sm:$0xff]
        %v859 = vld [vmem:[%s854 + $0x20] sm:$0xff]
        %v860 = vld [vmem:[%s854 + $0x28] sm:$0xff]
        %v861 = vld [vmem:[%s854 + $0x30] sm:$0xff]
        %v862 = vld [vmem:[%s854 + $0x38] sm:$0xff]
        %v863 = vld [vmem:[%s854 + $0x40] sm:$0xff]
        %v864 = vld [vmem:[%s854 + $0x48] sm:$0xff]
        %v865 = vld [vmem:[%s854 + $0x50] sm:$0xff]
        %v866 = vld [vmem:[%s854 + $0x58] sm:$0xff]
        %v879 = vunpack.c.l.b16 %v855
        %v880 = vunpack.c.h.b16 %v855
        %v881 = vunpack.c.l.b16 %v856
        %v882 = vunpack.c.h.b16 %v856
        %v883 = vunpack.c.l.b16 %v857
        %v884 = vunpack.c.h.b16 %v857
        %v885 = vunpack.c.l.b16 %v858
        %v886 = vunpack.c.h.b16 %v858
        %v887 = vunpack.c.l.b16 %v859
        %v888 = vunpack.c.h.b16 %v859
        %v889 = vunpack.c.l.b16 %v860
        %v890 = vunpack.c.h.b16 %v860
        %v891 = vunpack.c.l.b16 %v861
        %v892 = vunpack.c.h.b16 %v861
        %v893 = vunpack.c.l.b16 %v862
        %v894 = vunpack.c.h.b16 %v862
        %v895 = vunpack.c.l.b16 %v863
        %v896 = vunpack.c.h.b16 %v863
        %v897 = vunpack.c.l.b16 %v864
        %v898 = vunpack.c.h.b16 %v864
        %v899 = vunpack.c.l.b16 %v865
        %v900 = vunpack.c.h.b16 %v865
        %v901 = vunpack.c.l.b16 %v866
        %v902 = vunpack.c.h.b16 %v866
        %v903 = vpack.c.b16 %v881, %v879
        %v904 = vpack.c.b16 %v882, %v880
        %v905 = vpack.c.b16 %v885, %v883
        %v906 = vpack.c.b16 %v886, %v884
        %v907 = vpack.c.b16 %v889, %v887
        %v908 = vpack.c.b16 %v890, %v888
        %v909 = vpack.c.b16 %v893, %v891
        %v910 = vpack.c.b16 %v894, %v892
        %v911 = vpack.c.b16 %v897, %v895
        %v912 = vpack.c.b16 %v898, %v896
        %v913 = vpack.c.b16 %v901, %v899
        %v914 = vpack.c.b16 %v902, %v900
        %v928 = vsel %vm509, %v852, 0
        %v931 = vsel %vm509, %v853, 0
        %933 = vmatprep.subr.bf16.mxu0 %v904
        %934 = vmatpush1.bf16.msra.mxu0 %v903
        %935 = vmatprep.subr.bf16.mxu0 %v906
        %936 = vmatpush1.bf16.msra.mxu0 %v905
        %937 = vmatprep.subr.bf16.mxu0 %v908
        %938 = vmatpush1.bf16.msra.mxu0 %v907
        %939 = vmatprep.subr.bf16.mxu0 %v910
        %940 = vmatpush1.bf16.msra.mxu0 %v909
        %941 = vmatprep.subr.bf16.mxu0 %v912
        %942 = vmatpush1.bf16.msra.mxu0 %v911
        %943 = vmatprep.subr.bf16.mxu0 %v914
        %944 = vmatpush1.bf16.msra.mxu0 %v913
        %945 = vmatprep.subr.bf16.mxu0 0
        %946 = vmatpush1.bf16.msra.mxu0 0
        %947 = vmatprep.subr.bf16.mxu0 0
        %948 = vmatpush1.bf16.msra.mxu0 0
        %949 = vmatprep.subr.bf16.mxu0 0
        %950 = vmatpush1.bf16.msra.mxu0 0
        %951 = vmatprep.subr.bf16.mxu0 0
        %952 = vmatpush1.bf16.msra.mxu0 0
        %953 = vmatprep.subr.bf16.mxu0 0
        %954 = vmatpush1.bf16.msra.mxu0 0
        %955 = vmatprep.subr.bf16.mxu0 0
        %956 = vmatpush1.bf16.msra.mxu0 0
        %957 = vmatprep.subr.bf16.mxu0 0
        %958 = vmatpush1.bf16.msra.mxu0 0
        %959 = vmatprep.subr.bf16.mxu0 0
        %960 = vmatpush1.bf16.msra.mxu0 0
        %961 = vmatprep.subr.bf16.mxu0 0
        %962 = vmatpush1.bf16.msra.mxu0 0
        %963 = vmatprep.subr.bf16.mxu0 0
        %964 = vmatpush1.bf16.msra.mxu0 0
        %965 = vmatprep.mubr.bf16.mxu0 0
        %966 = vmatmul.mubr.bf16.gmra.mrb[0].mxu0 %v928
        %v967 = vpop.f32.mrb[0].mxu0
        %v968 = vadd.f32 0.0, %v967
        %v969 = vpop.f32.mrb[0].mxu0
        %v970 = vadd.f32 0.0, %v969
        %v971 = vpop.f32.mrb[0].mxu0
        %v972 = vadd.f32 0.0, %v971
        %v973 = vpop.f32.mrb[0].mxu0
        %v974 = vadd.f32 0.0, %v973
        %975 = vmatprep.mubr.bf16.mxu0 0
        %976 = vmatmul.mubr.bf16.gmra.mrb[0].mxu0 %v931
        %v977 = vpop.f32.mrb[0].mxu0
        %v978 = vadd.f32 0.0, %v977
        %v979 = vpop.f32.mrb[0].mxu0
        %v980 = vadd.f32 0.0, %v979
        %v981 = vpop.f32.mrb[0].mxu0
        %v982 = vadd.f32 0.0, %v981
        %v983 = vpop.f32.mrb[0].mxu0
        %v984 = vadd.f32 0.0, %v983
        %985 = vdwg.mxu0
        %v986 = vadd.f32 %v833, %v968
        %v987 = vadd.f32 %v834, %v970
        %v988 = vadd.f32 %v835, %v972
        %v989 = vadd.f32 %v836, %v974
        %v990 = vadd.f32 %v837, %v978
        %v991 = vadd.f32 %v838, %v980
        %v992 = vadd.f32 %v839, %v982
        %v993 = vadd.f32 %v840, %v984
        %v994 = vld [vmem:[%s392 + $0x1] sm:$0x7f]
        %v995 = vrot.slane %v688, 1
        %v997 = vrot.slane %v841, 2
        %v1000 = vrot.slane %v994, 3
        %v1002 = vsel %vm403, %v423, %v995
        %v1003 = vsel %vm405, %v995, %v997
        %v1004 = vsel %vm407, %v997, %v1000
        %v1005 = vpack.c.bf16 %v1003, %v1002
        %v1006 = vpack.c.bf16 %v1000, %v1004
        %s1007 = scalar_lea.vmem %s1, 384
        %v1008 = vld [vmem:[%s1007] sm:$0xff]
        %v1009 = vld [vmem:[%s1007 + $0x8] sm:$0xff]
        %v1010 = vld [vmem:[%s1007 + $0x10] sm:$0xff]
        %v1011 = vld [vmem:[%s1007 + $0x18] sm:$0xff]
        %v1012 = vld [vmem:[%s1007 + $0x20] sm:$0xff]
        %v1013 = vld [vmem:[%s1007 + $0x28] sm:$0xff]
        %v1014 = vld [vmem:[%s1007 + $0x30] sm:$0xff]
        %v1015 = vld [vmem:[%s1007 + $0x38] sm:$0xff]
        %v1016 = vld [vmem:[%s1007 + $0x40] sm:$0xff]
        %v1017 = vld [vmem:[%s1007 + $0x48] sm:$0xff]
        %v1018 = vld [vmem:[%s1007 + $0x50] sm:$0xff]
        %v1019 = vld [vmem:[%s1007 + $0x58] sm:$0xff]
        %v1032 = vunpack.c.l.b16 %v1008
        %v1033 = vunpack.c.h.b16 %v1008
        %v1034 = vunpack.c.l.b16 %v1009
        %v1035 = vunpack.c.h.b16 %v1009
        %v1036 = vunpack.c.l.b16 %v1010
        %v1037 = vunpack.c.h.b16 %v1010
        %v1038 = vunpack.c.l.b16 %v1011
        %v1039 = vunpack.c.h.b16 %v1011
        %v1040 = vunpack.c.l.b16 %v1012
        %v1041 = vunpack.c.h.b16 %v1012
        %v1042 = vunpack.c.l.b16 %v1013
        %v1043 = vunpack.c.h.b16 %v1013
        %v1044 = vunpack.c.l.b16 %v1014
        %v1045 = vunpack.c.h.b16 %v1014
        %v1046 = vunpack.c.l.b16 %v1015
        %v1047 = vunpack.c.h.b16 %v1015
        %v1048 = vunpack.c.l.b16 %v1016
        %v1049 = vunpack.c.h.b16 %v1016
        %v1050 = vunpack.c.l.b16 %v1017
        %v1051 = vunpack.c.h.b16 %v1017
        %v1052 = vunpack.c.l.b16 %v1018
        %v1053 = vunpack.c.h.b16 %v1018
        %v1054 = vunpack.c.l.b16 %v1019
        %v1055 = vunpack.c.h.b16 %v1019
        %v1056 = vpack.c.b16 %v1034, %v1032
        %v1057 = vpack.c.b16 %v1035, %v1033
        %v1058 = vpack.c.b16 %v1038, %v1036
        %v1059 = vpack.c.b16 %v1039, %v1037
        %v1060 = vpack.c.b16 %v1042, %v1040
        %v1061 = vpack.c.b16 %v1043, %v1041
        %v1062 = vpack.c.b16 %v1046, %v1044
        %v1063 = vpack.c.b16 %v1047, %v1045
        %v1064 = vpack.c.b16 %v1050, %v1048
        %v1065 = vpack.c.b16 %v1051, %v1049
        %v1066 = vpack.c.b16 %v1054, %v1052
        %v1067 = vpack.c.b16 %v1055, %v1053
        %v1081 = vsel %vm509, %v1005, 0
        %v1084 = vsel %vm509, %v1006, 0
        %1086 = vmatprep.subr.bf16.mxu0 %v1057
        %1087 = vmatpush1.bf16.msra.mxu0 %v1056
        %1088 = vmatprep.subr.bf16.mxu0 %v1059
        %1089 = vmatpush1.bf16.msra.mxu0 %v1058
        %1090 = vmatprep.subr.bf16.mxu0 %v1061
        %1091 = vmatpush1.bf16.msra.mxu0 %v1060
        %1092 = vmatprep.subr.bf16.mxu0 %v1063
        %1093 = vmatpush1.bf16.msra.mxu0 %v1062
        %1094 = vmatprep.subr.bf16.mxu0 %v1065
        %1095 = vmatpush1.bf16.msra.mxu0 %v1064
        %1096 = vmatprep.subr.bf16.mxu0 %v1067
        %1097 = vmatpush1.bf16.msra.mxu0 %v1066
        %1098 = vmatprep.subr.bf16.mxu0 0
        %1099 = vmatpush1.bf16.msra.mxu0 0
        %1100 = vmatprep.subr.bf16.mxu0 0
        %1101 = vmatpush1.bf16.msra.mxu0 0
        %1102 = vmatprep.subr.bf16.mxu0 0
        %1103 = vmatpush1.bf16.msra.mxu0 0
        %1104 = vmatprep.subr.bf16.mxu0 0
        %1105 = vmatpush1.bf16.msra.mxu0 0
        %1106 = vmatprep.subr.bf16.mxu0 0
        %1107 = vmatpush1.bf16.msra.mxu0 0
        %1108 = vmatprep.subr.bf16.mxu0 0
        %1109 = vmatpush1.bf16.msra.mxu0 0
        %1110 = vmatprep.subr.bf16.mxu0 0
        %1111 = vmatpush1.bf16.msra.mxu0 0
        %1112 = vmatprep.subr.bf16.mxu0 0
        %1113 = vmatpush1.bf16.msra.mxu0 0
        %1114 = vmatprep.subr.bf16.mxu0 0
        %1115 = vmatpush1.bf16.msra.mxu0 0
        %1116 = vmatprep.subr.bf16.mxu0 0
        %1117 = vmatpush1.bf16.msra.mxu0 0
        %1118 = vmatprep.mubr.bf16.mxu0 0
        %1119 = vmatmul.mubr.bf16.gmra.mrb[0].mxu0 %v1081
        %v1120 = vpop.f32.mrb[0].mxu0
        %v1121 = vadd.f32 0.0, %v1120
        %v1122 = vpop.f32.mrb[0].mxu0
        %v1123 = vadd.f32 0.0, %v1122
        %v1124 = vpop.f32.mrb[0].mxu0
        %v1125 = vadd.f32 0.0, %v1124
        %v1126 = vpop.f32.mrb[0].mxu0
        %v1127 = vadd.f32 0.0, %v1126
        %1128 = vmatprep.mubr.bf16.mxu0 0
        %1129 = vmatmul.mubr.bf16.gmra.mrb[0].mxu0 %v1084
        %v1130 = vpop.f32.mrb[0].mxu0
        %v1131 = vadd.f32 0.0, %v1130
        %v1132 = vpop.f32.mrb[0].mxu0
        %v1133 = vadd.f32 0.0, %v1132
        %v1134 = vpop.f32.mrb[0].mxu0
        %v1135 = vadd.f32 0.0, %v1134
        %v1136 = vpop.f32.mrb[0].mxu0
        %v1137 = vadd.f32 0.0, %v1136
        %1138 = vdwg.mxu0
        %v1139 = vadd.f32 %v986, %v1121
        %v1140 = vadd.f32 %v987, %v1123
        %v1141 = vadd.f32 %v988, %v1125
        %v1142 = vadd.f32 %v989, %v1127
        %v1143 = vadd.f32 %v990, %v1131
        %v1144 = vadd.f32 %v991, %v1133
        %v1145 = vadd.f32 %v992, %v1135
        %v1146 = vadd.f32 %v993, %v1137
        %v1147 = vmax.f32 %v1139, %v1140
        %v1148 = vmax.f32 %v1141, %v1142
        %vm1151 = vcmask 1040384
        %v1152 = vrot.slane %v1147, 7
        %v1153 = vrot.slane %v1148, 7
        %v1154 = vsel %vm1151, %v1152, %v1153
        %v1156 = vmax.f32 %v1147, %v1154
        %v1158 = vlaneseq
        %v1159 = vshrl.u32 %v1158, 7
        %v1160 = vsub.s32 0, %v1159
        %v1161 = vrot.slane %v385, %v1160
        %v1163 = vadd.f32 %v1156, %v1161
        %v1164 = vmax.f32 %v1163, 0.0
        %v1165 = vmax.f32 %v1143, %v1144
        %v1166 = vmax.f32 %v1145, %v1146
        %v1169 = vrot.slane %v1165, 7
        %v1170 = vrot.slane %v1166, 7
        %v1171 = vsel %vm1151, %v1169, %v1170
        %v1174 = vmax.f32 %v1148, %v1169
        %v1175 = vmax.f32 %v1165, %v1171
        %v1176 = vadd.f32 %v1174, %v1161
        %v1177 = vadd.f32 %v1175, %v1161
        %v1178 = vmax.f32 %v1176, 0.0
        %v1179 = vmax.f32 %v1177, 0.0
        %v1182 = vrot.slane %v1178, 1
        %v1183 = vrot.slane %v1179, 1
        %v1184 = vsel %vm403, %v1182, %v1183
        %v1187 = vsel %vm407, %v1164, %v1184
        %v1188 = vpack.c.bf16 %v1183, %v1187
        %v1189 = vld [vmem:[%s3] sm:$0xff]
        %v1190 = vld [vmem:[%s3 + $0x8] sm:$0xff]
        %v1191 = vld [vmem:[%s3 + $0x10] sm:$0xff]
        %v1192 = vld [vmem:[%s3 + $0x18] sm:$0xff]
        %v1193 = vld [vmem:[%s3 + $0x20] sm:$0xff]
        %v1194 = vld [vmem:[%s3 + $0x28] sm:$0xff]
        %v1195 = vld [vmem:[%s3 + $0x30] sm:$0xff]
        %v1196 = vld [vmem:[%s3 + $0x38] sm:$0xff]
        %v1197 = vld [vmem:[%s3 + $0x40] sm:$0xff]
        %v1198 = vld [vmem:[%s3 + $0x48] sm:$0xff]
        %v1199 = vld [vmem:[%s3 + $0x50] sm:$0xff]
        %v1200 = vld [vmem:[%s3 + $0x58] sm:$0xff]
        %v1201 = vld [vmem:[%s3 + $0x60] sm:$0xff]
        %v1202 = vld [vmem:[%s3 + $0x68] sm:$0xff]
        %v1203 = vld [vmem:[%s3 + $0x70] sm:$0xff]
        %v1204 = vld [vmem:[%s3 + $0x78] sm:$0xff]
        %vm1205 = vcmask 1041408
        %v1206 = vrot.slane %v1178, 6
        %v1207 = vrot.slane %v1179, 6
        %v1208 = vsel %vm1205, %v1206, %v1207
        %v1211 = vrot.slane %v1164, 4
        %v1213 = vsel %vm407, %v1208, %v1211
        %v1214 = vpack.c.bf16 %v1211, %v1213
        %s1215 = scalar_lea.vmem %s3, 128
        %v1216 = vld [vmem:[%s1215] sm:$0xff]
        %v1217 = vld [vmem:[%s1215 + $0x8] sm:$0xff]
        %v1218 = vld [vmem:[%s1215 + $0x10] sm:$0xff]
        %v1219 = vld [vmem:[%s1215 + $0x18] sm:$0xff]
        %v1220 = vld [vmem:[%s1215 + $0x20] sm:$0xff]
        %v1221 = vld [vmem:[%s1215 + $0x28] sm:$0xff]
        %v1222 = vld [vmem:[%s1215 + $0x30] sm:$0xff]
        %v1223 = vld [vmem:[%s1215 + $0x38] sm:$0xff]
        %v1224 = vld [vmem:[%s1215 + $0x40] sm:$0xff]
        %v1225 = vld [vmem:[%s1215 + $0x48] sm:$0xff]
        %v1226 = vld [vmem:[%s1215 + $0x50] sm:$0xff]
        %v1227 = vld [vmem:[%s1215 + $0x58] sm:$0xff]
        %v1228 = vld [vmem:[%s1215 + $0x60] sm:$0xff]
        %v1229 = vld [vmem:[%s1215 + $0x68] sm:$0xff]
        %v1230 = vld [vmem:[%s1215 + $0x70] sm:$0xff]
        %v1231 = vld [vmem:[%s1215 + $0x78] sm:$0xff]
        %v1248 = vunpack.c.l.b16 %v1216
        %v1249 = vunpack.c.h.b16 %v1216
        %v1250 = vunpack.c.l.b16 %v1217
        %v1251 = vunpack.c.h.b16 %v1217
        %v1252 = vunpack.c.l.b16 %v1218
        %v1253 = vunpack.c.h.b16 %v1218
        %v1254 = vunpack.c.l.b16 %v1219
        %v1255 = vunpack.c.h.b16 %v1219
        %v1256 = vunpack.c.l.b16 %v1220
        %v1257 = vunpack.c.h.b16 %v1220
        %v1258 = vunpack.c.l.b16 %v1221
        %v1259 = vunpack.c.h.b16 %v1221
        %v1260 = vunpack.c.l.b16 %v1222
        %v1261 = vunpack.c.h.b16 %v1222
        %v1262 = vunpack.c.l.b16 %v1223
        %v1263 = vunpack.c.h.b16 %v1223
        %v1264 = vunpack.c.l.b16 %v1224
        %v1265 = vunpack.c.h.b16 %v1224
        %v1266 = vunpack.c.l.b16 %v1225
        %v1267 = vunpack.c.h.b16 %v1225
        %v1268 = vunpack.c.l.b16 %v1226
        %v1269 = vunpack.c.h.b16 %v1226
        %v1270 = vunpack.c.l.b16 %v1227
        %v1271 = vunpack.c.h.b16 %v1227
        %v1272 = vunpack.c.l.b16 %v1228
        %v1273 = vunpack.c.h.b16 %v1228
        %v1274 = vunpack.c.l.b16 %v1229
        %v1275 = vunpack.c.h.b16 %v1229
        %v1276 = vunpack.c.l.b16 %v1230
        %v1277 = vunpack.c.h.b16 %v1230
        %v1278 = vunpack.c.l.b16 %v1231
        %v1279 = vunpack.c.h.b16 %v1231
        %v1280 = vpack.c.b16 %v1250, %v1248
        %v1281 = vpack.c.b16 %v1251, %v1249
        %v1282 = vpack.c.b16 %v1254, %v1252
        %v1283 = vpack.c.b16 %v1255, %v1253
        %v1284 = vpack.c.b16 %v1258, %v1256
        %v1285 = vpack.c.b16 %v1259, %v1257
        %v1286 = vpack.c.b16 %v1262, %v1260
        %v1287 = vpack.c.b16 %v1263, %v1261
        %v1288 = vpack.c.b16 %v1266, %v1264
        %v1289 = vpack.c.b16 %v1267, %v1265
        %v1290 = vpack.c.b16 %v1270, %v1268
        %v1291 = vpack.c.b16 %v1271, %v1269
        %v1292 = vpack.c.b16 %v1274, %v1272
        %v1293 = vpack.c.b16 %v1275, %v1273
        %v1294 = vpack.c.b16 %v1278, %v1276
        %v1295 = vpack.c.b16 %v1279, %v1277
        %1312 = vmatprep.subr.bf16.mxu0 %v1281
        %1313 = vmatpush1.bf16.msra.mxu0 %v1280
        %1314 = vmatprep.subr.bf16.mxu0 %v1283
        %1315 = vmatpush1.bf16.msra.mxu0 %v1282
        %1316 = vmatprep.subr.bf16.mxu0 %v1285
        %1317 = vmatpush1.bf16.msra.mxu0 %v1284
        %1318 = vmatprep.subr.bf16.mxu0 %v1287
        %1319 = vmatpush1.bf16.msra.mxu0 %v1286
        %1320 = vmatprep.subr.bf16.mxu0 %v1289
        %1321 = vmatpush1.bf16.msra.mxu0 %v1288
        %1322 = vmatprep.subr.bf16.mxu0 %v1291
        %1323 = vmatpush1.bf16.msra.mxu0 %v1290
        %1324 = vmatprep.subr.bf16.mxu0 %v1293
        %1325 = vmatpush1.bf16.msra.mxu0 %v1292
        %1326 = vmatprep.subr.bf16.mxu0 %v1295
        %1327 = vmatpush1.bf16.msra.mxu0 %v1294
        %1328 = vmatprep.subr.bf16.mxu0 0
        %1329 = vmatpush1.bf16.msra.mxu0 0
        %1330 = vmatprep.subr.bf16.mxu0 0
        %1331 = vmatpush1.bf16.msra.mxu0 0
        %1332 = vmatprep.subr.bf16.mxu0 0
        %1333 = vmatpush1.bf16.msra.mxu0 0
        %1334 = vmatprep.subr.bf16.mxu0 0
        %1335 = vmatpush1.bf16.msra.mxu0 0
        %1336 = vmatprep.subr.bf16.mxu0 0
        %1337 = vmatpush1.bf16.msra.mxu0 0
        %1338 = vmatprep.subr.bf16.mxu0 0
        %1339 = vmatpush1.bf16.msra.mxu0 0
        %1340 = vmatprep.subr.bf16.mxu0 0
        %1341 = vmatpush1.bf16.msra.mxu0 0
        %1342 = vmatprep.subr.bf16.mxu0 0
        %1343 = vmatpush1.bf16.msra.mxu0 0
        %1344 = vmatprep.mubr.bf16.mxu0 0
        %1345 = vmatmul.mubr.bf16.gmra.mrb[0].mxu0 %v1214
        %v1346 = vpop.f32.mrb[0].mxu0
        %v1347 = vadd.f32 0.0, %v1346
        %v1348 = vpop.f32.mrb[0].mxu0
        %v1349 = vadd.f32 0.0, %v1348
        %v1350 = vpop.f32.mrb[0].mxu0
        %v1351 = vadd.f32 0.0, %v1350
        %v1352 = vpop.f32.mrb[0].mxu0
        %v1353 = vadd.f32 0.0, %v1352
        %1354 = vdwg.mxu0
        %v1371 = vunpack.c.l.b16 %v1189
        %v1372 = vunpack.c.h.b16 %v1189
        %v1373 = vunpack.c.l.b16 %v1190
        %v1374 = vunpack.c.h.b16 %v1190
        %v1375 = vunpack.c.l.b16 %v1191
        %v1376 = vunpack.c.h.b16 %v1191
        %v1377 = vunpack.c.l.b16 %v1192
        %v1378 = vunpack.c.h.b16 %v1192
        %v1379 = vunpack.c.l.b16 %v1193
        %v1380 = vunpack.c.h.b16 %v1193
        %v1381 = vunpack.c.l.b16 %v1194
        %v1382 = vunpack.c.h.b16 %v1194
        %v1383 = vunpack.c.l.b16 %v1195
        %v1384 = vunpack.c.h.b16 %v1195
        %v1385 = vunpack.c.l.b16 %v1196
        %v1386 = vunpack.c.h.b16 %v1196
        %v1387 = vunpack.c.l.b16 %v1197
        %v1388 = vunpack.c.h.b16 %v1197
        %v1389 = vunpack.c.l.b16 %v1198
        %v1390 = vunpack.c.h.b16 %v1198
        %v1391 = vunpack.c.l.b16 %v1199
        %v1392 = vunpack.c.h.b16 %v1199
        %v1393 = vunpack.c.l.b16 %v1200
        %v1394 = vunpack.c.h.b16 %v1200
        %v1395 = vunpack.c.l.b16 %v1201
        %v1396 = vunpack.c.h.b16 %v1201
        %v1397 = vunpack.c.l.b16 %v1202
        %v1398 = vunpack.c.h.b16 %v1202
        %v1399 = vunpack.c.l.b16 %v1203
        %v1400 = vunpack.c.h.b16 %v1203
        %v1401 = vunpack.c.l.b16 %v1204
        %v1402 = vunpack.c.h.b16 %v1204
        %v1403 = vpack.c.b16 %v1373, %v1371
        %v1404 = vpack.c.b16 %v1374, %v1372
        %v1405 = vpack.c.b16 %v1377, %v1375
        %v1406 = vpack.c.b16 %v1378, %v1376
        %v1407 = vpack.c.b16 %v1381, %v1379
        %v1408 = vpack.c.b16 %v1382, %v1380
        %v1409 = vpack.c.b16 %v1385, %v1383
        %v1410 = vpack.c.b16 %v1386, %v1384
        %v1411 = vpack.c.b16 %v1389, %v1387
        %v1412 = vpack.c.b16 %v1390, %v1388
        %v1413 = vpack.c.b16 %v1393, %v1391
        %v1414 = vpack.c.b16 %v1394, %v1392
        %v1415 = vpack.c.b16 %v1397, %v1395
        %v1416 = vpack.c.b16 %v1398, %v1396
        %v1417 = vpack.c.b16 %v1401, %v1399
        %v1418 = vpack.c.b16 %v1402, %v1400
        %1435 = vmatprep.subr.bf16.mxu0 %v1404
        %1436 = vmatpush1.bf16.msra.mxu0 %v1403
        %1437 = vmatprep.subr.bf16.mxu0 %v1406
        %1438 = vmatpush1.bf16.msra.mxu0 %v1405
        %1439 = vmatprep.subr.bf16.mxu0 %v1408
        %1440 = vmatpush1.bf16.msra.mxu0 %v1407
        %1441 = vmatprep.subr.bf16.mxu0 %v1410
        %1442 = vmatpush1.bf16.msra.mxu0 %v1409
        %1443 = vmatprep.subr.bf16.mxu0 %v1412
        %1444 = vmatpush1.bf16.msra.mxu0 %v1411
        %1445 = vmatprep.subr.bf16.mxu0 %v1414
        %1446 = vmatpush1.bf16.msra.mxu0 %v1413
        %1447 = vmatprep.subr.bf16.mxu0 %v1416
        %1448 = vmatpush1.bf16.msra.mxu0 %v1415
        %1449 = vmatprep.subr.bf16.mxu0 %v1418
        %1450 = vmatpush1.bf16.msra.mxu0 %v1417
        %1451 = vmatprep.subr.bf16.mxu0 0
        %1452 = vmatpush1.bf16.msra.mxu0 0
        %1453 = vmatprep.subr.bf16.mxu0 0
        %1454 = vmatpush1.bf16.msra.mxu0 0
        %1455 = vmatprep.subr.bf16.mxu0 0
        %1456 = vmatpush1.bf16.msra.mxu0 0
        %1457 = vmatprep.subr.bf16.mxu0 0
        %1458 = vmatpush1.bf16.msra.mxu0 0
        %1459 = vmatprep.subr.bf16.mxu0 0
        %1460 = vmatpush1.bf16.msra.mxu0 0
        %1461 = vmatprep.subr.bf16.mxu0 0
        %1462 = vmatpush1.bf16.msra.mxu0 0
        %1463 = vmatprep.subr.bf16.mxu0 0
        %1464 = vmatpush1.bf16.msra.mxu0 0
        %1465 = vmatprep.subr.bf16.mxu0 0
        %1466 = vmatpush1.bf16.msra.mxu0 0
        %1467 = vmatprep.mubr.bf16.mxu0 0
        %1468 = vmatmul.mubr.bf16.gmra.mrb[0].mxu0 %v1188
        %v1469 = vpop.f32.mrb[0].mxu0
        %v1470 = vadd.f32 %v1347, %v1469
        %v1471 = vpop.f32.mrb[0].mxu0
        %v1472 = vadd.f32 %v1349, %v1471
        %v1473 = vpop.f32.mrb[0].mxu0
        %v1474 = vadd.f32 %v1351, %v1473
        %v1475 = vpop.f32.mrb[0].mxu0
        %v1476 = vadd.f32 %v1353, %v1475
        %1477 = vdwg.mxu0
        %v1478 = vrot.slane %v1164, 1
        %v1480 = vrot.slane %v1178, 2
        %v1481 = vrot.slane %v1179, 2
        %v1482 = vsel %vm405, %v1480, %v1481
        %v1485 = vsel %vm407, %v1478, %v1482
        %v1486 = vpack.c.bf16 %v1481, %v1485
        %s1487 = scalar_lea.vmem %s3, 256
        %v1488 = vld [vmem:[%s1487] sm:$0xff]
        %v1489 = vld [vmem:[%s1487 + $0x8] sm:$0xff]
        %v1490 = vld [vmem:[%s1487 + $0x10] sm:$0xff]
        %v1491 = vld [vmem:[%s1487 + $0x18] sm:$0xff]
        %v1492 = vld [vmem:[%s1487 + $0x20] sm:$0xff]
        %v1493 = vld [vmem:[%s1487 + $0x28] sm:$0xff]
        %v1494 = vld [vmem:[%s1487 + $0x30] sm:$0xff]
        %v1495 = vld [vmem:[%s1487 + $0x38] sm:$0xff]
        %v1496 = vld [vmem:[%s1487 + $0x40] sm:$0xff]
        %v1497 = vld [vmem:[%s1487 + $0x48] sm:$0xff]
        %v1498 = vld [vmem:[%s1487 + $0x50] sm:$0xff]
        %v1499 = vld [vmem:[%s1487 + $0x58] sm:$0xff]
        %v1500 = vld [vmem:[%s1487 + $0x60] sm:$0xff]
        %v1501 = vld [vmem:[%s1487 + $0x68] sm:$0xff]
        %v1502 = vld [vmem:[%s1487 + $0x70] sm:$0xff]
        %v1503 = vld [vmem:[%s1487 + $0x78] sm:$0xff]
        %v1520 = vunpack.c.l.b16 %v1488
        %v1521 = vunpack.c.h.b16 %v1488
        %v1522 = vunpack.c.l.b16 %v1489
        %v1523 = vunpack.c.h.b16 %v1489
        %v1524 = vunpack.c.l.b16 %v1490
        %v1525 = vunpack.c.h.b16 %v1490
        %v1526 = vunpack.c.l.b16 %v1491
        %v1527 = vunpack.c.h.b16 %v1491
        %v1528 = vunpack.c.l.b16 %v1492
        %v1529 = vunpack.c.h.b16 %v1492
        %v1530 = vunpack.c.l.b16 %v1493
        %v1531 = vunpack.c.h.b16 %v1493
        %v1532 = vunpack.c.l.b16 %v1494
        %v1533 = vunpack.c.h.b16 %v1494
        %v1534 = vunpack.c.l.b16 %v1495
        %v1535 = vunpack.c.h.b16 %v1495
        %v1536 = vunpack.c.l.b16 %v1496
        %v1537 = vunpack.c.h.b16 %v1496
        %v1538 = vunpack.c.l.b16 %v1497
        %v1539 = vunpack.c.h.b16 %v1497
        %v1540 = vunpack.c.l.b16 %v1498
        %v1541 = vunpack.c.h.b16 %v1498
        %v1542 = vunpack.c.l.b16 %v1499
        %v1543 = vunpack.c.h.b16 %v1499
        %v1544 = vunpack.c.l.b16 %v1500
        %v1545 = vunpack.c.h.b16 %v1500
        %v1546 = vunpack.c.l.b16 %v1501
        %v1547 = vunpack.c.h.b16 %v1501
        %v1548 = vunpack.c.l.b16 %v1502
        %v1549 = vunpack.c.h.b16 %v1502
        %v1550 = vunpack.c.l.b16 %v1503
        %v1551 = vunpack.c.h.b16 %v1503
        %v1552 = vpack.c.b16 %v1522, %v1520
        %v1553 = vpack.c.b16 %v1523, %v1521
        %v1554 = vpack.c.b16 %v1526, %v1524
        %v1555 = vpack.c.b16 %v1527, %v1525
        %v1556 = vpack.c.b16 %v1530, %v1528
        %v1557 = vpack.c.b16 %v1531, %v1529
        %v1558 = vpack.c.b16 %v1534, %v1532
        %v1559 = vpack.c.b16 %v1535, %v1533
        %v1560 = vpack.c.b16 %v1538, %v1536
        %v1561 = vpack.c.b16 %v1539, %v1537
        %v1562 = vpack.c.b16 %v1542, %v1540
        %v1563 = vpack.c.b16 %v1543, %v1541
        %v1564 = vpack.c.b16 %v1546, %v1544
        %v1565 = vpack.c.b16 %v1547, %v1545
        %v1566 = vpack.c.b16 %v1550, %v1548
        %v1567 = vpack.c.b16 %v1551, %v1549
        %1584 = vmatprep.subr.bf16.mxu0 %v1553
        %1585 = vmatpush1.bf16.msra.mxu0 %v1552
        %1586 = vmatprep.subr.bf16.mxu0 %v1555
        %1587 = vmatpush1.bf16.msra.mxu0 %v1554
        %1588 = vmatprep.subr.bf16.mxu0 %v1557
        %1589 = vmatpush1.bf16.msra.mxu0 %v1556
        %1590 = vmatprep.subr.bf16.mxu0 %v1559
        %1591 = vmatpush1.bf16.msra.mxu0 %v1558
        %1592 = vmatprep.subr.bf16.mxu0 %v1561
        %1593 = vmatpush1.bf16.msra.mxu0 %v1560
        %1594 = vmatprep.subr.bf16.mxu0 %v1563
        %1595 = vmatpush1.bf16.msra.mxu0 %v1562
        %1596 = vmatprep.subr.bf16.mxu0 %v1565
        %1597 = vmatpush1.bf16.msra.mxu0 %v1564
        %1598 = vmatprep.subr.bf16.mxu0 %v1567
        %1599 = vmatpush1.bf16.msra.mxu0 %v1566
        %1600 = vmatprep.subr.bf16.mxu0 0
        %1601 = vmatpush1.bf16.msra.mxu0 0
        %1602 = vmatprep.subr.bf16.mxu0 0
        %1603 = vmatpush1.bf16.msra.mxu0 0
        %1604 = vmatprep.subr.bf16.mxu0 0
        %1605 = vmatpush1.bf16.msra.mxu0 0
        %1606 = vmatprep.subr.bf16.mxu0 0
        %1607 = vmatpush1.bf16.msra.mxu0 0
        %1608 = vmatprep.subr.bf16.mxu0 0
        %1609 = vmatpush1.bf16.msra.mxu0 0
        %1610 = vmatprep.subr.bf16.mxu0 0
        %1611 = vmatpush1.bf16.msra.mxu0 0
        %1612 = vmatprep.subr.bf16.mxu0 0
        %1613 = vmatpush1.bf16.msra.mxu0 0
        %1614 = vmatprep.subr.bf16.mxu0 0
        %1615 = vmatpush1.bf16.msra.mxu0 0
        %1616 = vmatprep.mubr.bf16.mxu0 0
        %1617 = vmatmul.mubr.bf16.gmra.mrb[0].mxu0 %v1486
        %v1618 = vpop.f32.mrb[0].mxu0
        %v1619 = vadd.f32 0.0, %v1618
        %v1620 = vpop.f32.mrb[0].mxu0
        %v1621 = vadd.f32 0.0, %v1620
        %v1622 = vpop.f32.mrb[0].mxu0
        %v1623 = vadd.f32 0.0, %v1622
        %v1624 = vpop.f32.mrb[0].mxu0
        %v1625 = vadd.f32 0.0, %v1624
        %1626 = vdwg.mxu0
        %v1627 = vadd.f32 %v1470, %v1619
        %v1628 = vadd.f32 %v1472, %v1621
        %v1629 = vadd.f32 %v1474, %v1623
        %v1630 = vadd.f32 %v1476, %v1625
        %v1631 = vrot.slane %v1178, 7
        %v1632 = vrot.slane %v1179, 7
        %v1633 = vsel %vm1151, %v1631, %v1632
        %v1635 = vrot.slane %v1164, 5
        %v1637 = vsel %vm407, %v1633, %v1635
        %v1638 = vpack.c.bf16 %v1635, %v1637
        %s1639 = scalar_lea.vmem %s3, 384
        %v1640 = vld [vmem:[%s1639] sm:$0xff]
        %v1641 = vld [vmem:[%s1639 + $0x8] sm:$0xff]
        %v1642 = vld [vmem:[%s1639 + $0x10] sm:$0xff]
        %v1643 = vld [vmem:[%s1639 + $0x18] sm:$0xff]
        %v1644 = vld [vmem:[%s1639 + $0x20] sm:$0xff]
        %v1645 = vld [vmem:[%s1639 + $0x28] sm:$0xff]
        %v1646 = vld [vmem:[%s1639 + $0x30] sm:$0xff]
        %v1647 = vld [vmem:[%s1639 + $0x38] sm:$0xff]
        %v1648 = vld [vmem:[%s1639 + $0x40] sm:$0xff]
        %v1649 = vld [vmem:[%s1639 + $0x48] sm:$0xff]
        %v1650 = vld [vmem:[%s1639 + $0x50] sm:$0xff]
        %v1651 = vld [vmem:[%s1639 + $0x58] sm:$0xff]
        %v1652 = vld [vmem:[%s1639 + $0x60] sm:$0xff]
        %v1653 = vld [vmem:[%s1639 + $0x68] sm:$0xff]
        %v1654 = vld [vmem:[%s1639 + $0x70] sm:$0xff]
        %v1655 = vld [vmem:[%s1639 + $0x78] sm:$0xff]
        %v1672 = vunpack.c.l.b16 %v1640
        %v1673 = vunpack.c.h.b16 %v1640
        %v1674 = vunpack.c.l.b16 %v1641
        %v1675 = vunpack.c.h.b16 %v1641
        %v1676 = vunpack.c.l.b16 %v1642
        %v1677 = vunpack.c.h.b16 %v1642
        %v1678 = vunpack.c.l.b16 %v1643
        %v1679 = vunpack.c.h.b16 %v1643
        %v1680 = vunpack.c.l.b16 %v1644
        %v1681 = vunpack.c.h.b16 %v1644
        %v1682 = vunpack.c.l.b16 %v1645
        %v1683 = vunpack.c.h.b16 %v1645
        %v1684 = vunpack.c.l.b16 %v1646
        %v1685 = vunpack.c.h.b16 %v1646
        %v1686 = vunpack.c.l.b16 %v1647
        %v1687 = vunpack.c.h.b16 %v1647
        %v1688 = vunpack.c.l.b16 %v1648
        %v1689 = vunpack.c.h.b16 %v1648
        %v1690 = vunpack.c.l.b16 %v1649
        %v1691 = vunpack.c.h.b16 %v1649
        %v1692 = vunpack.c.l.b16 %v1650
        %v1693 = vunpack.c.h.b16 %v1650
        %v1694 = vunpack.c.l.b16 %v1651
        %v1695 = vunpack.c.h.b16 %v1651
        %v1696 = vunpack.c.l.b16 %v1652
        %v1697 = vunpack.c.h.b16 %v1652
        %v1698 = vunpack.c.l.b16 %v1653
        %v1699 = vunpack.c.h.b16 %v1653
        %v1700 = vunpack.c.l.b16 %v1654
        %v1701 = vunpack.c.h.b16 %v1654
        %v1702 = vunpack.c.l.b16 %v1655
        %v1703 = vunpack.c.h.b16 %v1655
        %v1704 = vpack.c.b16 %v1674, %v1672
        %v1705 = vpack.c.b16 %v1675, %v1673
        %v1706 = vpack.c.b16 %v1678, %v1676
        %v1707 = vpack.c.b16 %v1679, %v1677
        %v1708 = vpack.c.b16 %v1682, %v1680
        %v1709 = vpack.c.b16 %v1683, %v1681
        %v1710 = vpack.c.b16 %v1686, %v1684
        %v1711 = vpack.c.b16 %v1687, %v1685
        %v1712 = vpack.c.b16 %v1690, %v1688
        %v1713 = vpack.c.b16 %v1691, %v1689
        %v1714 = vpack.c.b16 %v1694, %v1692
        %v1715 = vpack.c.b16 %v1695, %v1693
        %v1716 = vpack.c.b16 %v1698, %v1696
        %v1717 = vpack.c.b16 %v1699, %v1697
        %v1718 = vpack.c.b16 %v1702, %v1700
        %v1719 = vpack.c.b16 %v1703, %v1701
        %1736 = vmatprep.subr.bf16.mxu0 %v1705
        %1737 = vmatpush1.bf16.msra.mxu0 %v1704
        %1738 = vmatprep.subr.bf16.mxu0 %v1707
        %1739 = vmatpush1.bf16.msra.mxu0 %v1706
        %1740 = vmatprep.subr.bf16.mxu0 %v1709
        %1741 = vmatpush1.bf16.msra.mxu0 %v1708
        %1742 = vmatprep.subr.bf16.mxu0 %v1711
        %1743 = vmatpush1.bf16.msra.mxu0 %v1710
        %1744 = vmatprep.subr.bf16.mxu0 %v1713
        %1745 = vmatpush1.bf16.msra.mxu0 %v1712
        %1746 = vmatprep.subr.bf16.mxu0 %v1715
        %1747 = vmatpush1.bf16.msra.mxu0 %v1714
        %1748 = vmatprep.subr.bf16.mxu0 %v1717
        %1749 = vmatpush1.bf16.msra.mxu0 %v1716
        %1750 = vmatprep.subr.bf16.mxu0 %v1719
        %1751 = vmatpush1.bf16.msra.mxu0 %v1718
        %1752 = vmatprep.subr.bf16.mxu0 0
        %1753 = vmatpush1.bf16.msra.mxu0 0
        %1754 = vmatprep.subr.bf16.mxu0 0
        %1755 = vmatpush1.bf16.msra.mxu0 0
        %1756 = vmatprep.subr.bf16.mxu0 0
        %1757 = vmatpush1.bf16.msra.mxu0 0
        %1758 = vmatprep.subr.bf16.mxu0 0
        %1759 = vmatpush1.bf16.msra.mxu0 0
        %1760 = vmatprep.subr.bf16.mxu0 0
        %1761 = vmatpush1.bf16.msra.mxu0 0
        %1762 = vmatprep.subr.bf16.mxu0 0
        %1763 = vmatpush1.bf16.msra.mxu0 0
        %1764 = vmatprep.subr.bf16.mxu0 0
        %1765 = vmatpush1.bf16.msra.mxu0 0
        %1766 = vmatprep.subr.bf16.mxu0 0
        %1767 = vmatpush1.bf16.msra.mxu0 0
        %1768 = vmatprep.mubr.bf16.mxu0 0
        %1769 = vmatmul.mubr.bf16.gmra.mrb[0].mxu0 %v1638
        %v1770 = vpop.f32.mrb[0].mxu0
        %v1771 = vadd.f32 0.0, %v1770
        %v1772 = vpop.f32.mrb[0].mxu0
        %v1773 = vadd.f32 0.0, %v1772
        %v1774 = vpop.f32.mrb[0].mxu0
        %v1775 = vadd.f32 0.0, %v1774
        %v1776 = vpop.f32.mrb[0].mxu0
        %v1777 = vadd.f32 0.0, %v1776
        %1778 = vdwg.mxu0
        %v1779 = vadd.f32 %v1627, %v1771
        %v1780 = vadd.f32 %v1628, %v1773
        %v1781 = vadd.f32 %v1629, %v1775
        %v1782 = vadd.f32 %v1630, %v1777
        %v1783 = vrot.slane %v1164, 2
        %v1785 = vrot.slane %v1179, 3
        %v1787 = vsel %vm407, %v1783, %v1785
        %v1788 = vpack.c.bf16 %v1785, %v1787
        %s1789 = scalar_lea.vmem %s3, 512
        %v1790 = vld [vmem:[%s1789] sm:$0xff]
        %v1791 = vld [vmem:[%s1789 + $0x8] sm:$0xff]
        %v1792 = vld [vmem:[%s1789 + $0x10] sm:$0xff]
        %v1793 = vld [vmem:[%s1789 + $0x18] sm:$0xff]
        %v1794 = vld [vmem:[%s1789 + $0x20] sm:$0xff]
        %v1795 = vld [vmem:[%s1789 + $0x28] sm:$0xff]
        %v1796 = vld [vmem:[%s1789 + $0x30] sm:$0xff]
        %v1797 = vld [vmem:[%s1789 + $0x38] sm:$0xff]
        %v1798 = vld [vmem:[%s1789 + $0x40] sm:$0xff]
        %v1799 = vld [vmem:[%s1789 + $0x48] sm:$0xff]
        %v1800 = vld [vmem:[%s1789 + $0x50] sm:$0xff]
        %v1801 = vld [vmem:[%s1789 + $0x58] sm:$0xff]
        %v1802 = vld [vmem:[%s1789 + $0x60] sm:$0xff]
        %v1803 = vld [vmem:[%s1789 + $0x68] sm:$0xff]
        %v1804 = vld [vmem:[%s1789 + $0x70] sm:$0xff]
        %v1805 = vld [vmem:[%s1789 + $0x78] sm:$0xff]
        %v1822 = vunpack.c.l.b16 %v1790
        %v1823 = vunpack.c.h.b16 %v1790
        %v1824 = vunpack.c.l.b16 %v1791
        %v1825 = vunpack.c.h.b16 %v1791
        %v1826 = vunpack.c.l.b16 %v1792
        %v1827 = vunpack.c.h.b16 %v1792
        %v1828 = vunpack.c.l.b16 %v1793
        %v1829 = vunpack.c.h.b16 %v1793
        %v1830 = vunpack.c.l.b16 %v1794
        %v1831 = vunpack.c.h.b16 %v1794
        %v1832 = vunpack.c.l.b16 %v1795
        %v1833 = vunpack.c.h.b16 %v1795
        %v1834 = vunpack.c.l.b16 %v1796
        %v1835 = vunpack.c.h.b16 %v1796
        %v1836 = vunpack.c.l.b16 %v1797
        %v1837 = vunpack.c.h.b16 %v1797
        %v1838 = vunpack.c.l.b16 %v1798
        %v1839 = vunpack.c.h.b16 %v1798
        %v1840 = vunpack.c.l.b16 %v1799
        %v1841 = vunpack.c.h.b16 %v1799
        %v1842 = vunpack.c.l.b16 %v1800
        %v1843 = vunpack.c.h.b16 %v1800
        %v1844 = vunpack.c.l.b16 %v1801
        %v1845 = vunpack.c.h.b16 %v1801
        %v1846 = vunpack.c.l.b16 %v1802
        %v1847 = vunpack.c.h.b16 %v1802
        %v1848 = vunpack.c.l.b16 %v1803
        %v1849 = vunpack.c.h.b16 %v1803
        %v1850 = vunpack.c.l.b16 %v1804
        %v1851 = vunpack.c.h.b16 %v1804
        %v1852 = vunpack.c.l.b16 %v1805
        %v1853 = vunpack.c.h.b16 %v1805
        %v1854 = vpack.c.b16 %v1824, %v1822
        %v1855 = vpack.c.b16 %v1825, %v1823
        %v1856 = vpack.c.b16 %v1828, %v1826
        %v1857 = vpack.c.b16 %v1829, %v1827
        %v1858 = vpack.c.b16 %v1832, %v1830
        %v1859 = vpack.c.b16 %v1833, %v1831
        %v1860 = vpack.c.b16 %v1836, %v1834
        %v1861 = vpack.c.b16 %v1837, %v1835
        %v1862 = vpack.c.b16 %v1840, %v1838
        %v1863 = vpack.c.b16 %v1841, %v1839
        %v1864 = vpack.c.b16 %v1844, %v1842
        %v1865 = vpack.c.b16 %v1845, %v1843
        %v1866 = vpack.c.b16 %v1848, %v1846
        %v1867 = vpack.c.b16 %v1849, %v1847
        %v1868 = vpack.c.b16 %v1852, %v1850
        %v1869 = vpack.c.b16 %v1853, %v1851
        %1886 = vmatprep.subr.bf16.mxu0 %v1855
        %1887 = vmatpush1.bf16.msra.mxu0 %v1854
        %1888 = vmatprep.subr.bf16.mxu0 %v1857
        %1889 = vmatpush1.bf16.msra.mxu0 %v1856
        %1890 = vmatprep.subr.bf16.mxu0 %v1859
        %1891 = vmatpush1.bf16.msra.mxu0 %v1858
        %1892 = vmatprep.subr.bf16.mxu0 %v1861
        %1893 = vmatpush1.bf16.msra.mxu0 %v1860
        %1894 = vmatprep.subr.bf16.mxu0 %v1863
        %1895 = vmatpush1.bf16.msra.mxu0 %v1862
        %1896 = vmatprep.subr.bf16.mxu0 %v1865
        %1897 = vmatpush1.bf16.msra.mxu0 %v1864
        %1898 = vmatprep.subr.bf16.mxu0 %v1867
        %1899 = vmatpush1.bf16.msra.mxu0 %v1866
        %1900 = vmatprep.subr.bf16.mxu0 %v1869
        %1901 = vmatpush1.bf16.msra.mxu0 %v1868
        %1902 = vmatprep.subr.bf16.mxu0 0
        %1903 = vmatpush1.bf16.msra.mxu0 0
        %1904 = vmatprep.subr.bf16.mxu0 0
        %1905 = vmatpush1.bf16.msra.mxu0 0
        %1906 = vmatprep.subr.bf16.mxu0 0
        %1907 = vmatpush1.bf16.msra.mxu0 0
        %1908 = vmatprep.subr.bf16.mxu0 0
        %1909 = vmatpush1.bf16.msra.mxu0 0
        %1910 = vmatprep.subr.bf16.mxu0 0
        %1911 = vmatpush1.bf16.msra.mxu0 0
        %1912 = vmatprep.subr.bf16.mxu0 0
        %1913 = vmatpush1.bf16.msra.mxu0 0
        %1914 = vmatprep.subr.bf16.mxu0 0
        %1915 = vmatpush1.bf16.msra.mxu0 0
        %1916 = vmatprep.subr.bf16.mxu0 0
        %1917 = vmatpush1.bf16.msra.mxu0 0
        %1918 = vmatprep.mubr.bf16.mxu0 0
        %1919 = vmatmul.mubr.bf16.gmra.mrb[0].mxu0 %v1788
        %v1920 = vpop.f32.mrb[0].mxu0
        %v1921 = vadd.f32 0.0, %v1920
        %v1922 = vpop.f32.mrb[0].mxu0
        %v1923 = vadd.f32 0.0, %v1922
        %v1924 = vpop.f32.mrb[0].mxu0
        %v1925 = vadd.f32 0.0, %v1924
        %v1926 = vpop.f32.mrb[0].mxu0
        %v1927 = vadd.f32 0.0, %v1926
        %1928 = vdwg.mxu0
        %v1929 = vadd.f32 %v1779, %v1921
        %v1930 = vadd.f32 %v1780, %v1923
        %v1931 = vadd.f32 %v1781, %v1925
        %v1932 = vadd.f32 %v1782, %v1927
        %v1933 = vmax.f32 %v1929, %v1930
        %v1934 = vmax.f32 %v1931, %v1932
        %vm1937 = vcmask 1042432
        %v1938 = vrot.slane %v1933, 5
        %v1939 = vrot.slane %v1934, 5
        %v1940 = vsel %vm1937, %v1938, %v1939
        %v1942 = vmax.f32 %v1933, %v1940
        %v1944 = vlaneseq
        %v1945 = vshrl.u32 %v1944, 7
        %v1946 = vsub.s32 0, %v1945
        %v1947 = vrot.slane %v386, %v1946
        %v1949 = vadd.f32 %v1942, %v1947
        %v1950 = vmax.f32 %v1949, 0.0
        %v1951 = vpack.c.bf16 %v1950, %v1950
        %v1952 = vld [vmem:[%s5] sm:$0xf]
        %v1953 = vld [vmem:[%s5 + $0x4] sm:$0xf]
        %v1954 = vld [vmem:[%s5 + $0x8] sm:$0xf]
        %v1955 = vld [vmem:[%s5 + $0xc] sm:$0xf]
        %v1956 = vld [vmem:[%s5 + $0x10] sm:$0xf]
        %v1957 = vld [vmem:[%s5 + $0x14] sm:$0xf]
        %v1958 = vld [vmem:[%s5 + $0x18] sm:$0xf]
        %v1959 = vld [vmem:[%s5 + $0x1c] sm:$0xf]
        %v1960 = vld [vmem:[%s5 + $0x20] sm:$0xf]
        %v1961 = vld [vmem:[%s5 + $0x24] sm:$0xf]
        %v1962 = vld [vmem:[%s5 + $0x28] sm:$0xf]
        %v1963 = vld [vmem:[%s5 + $0x2c] sm:$0xf]
        %v1964 = vld [vmem:[%s5 + $0x30] sm:$0xf]
        %v1965 = vld [vmem:[%s5 + $0x34] sm:$0xf]
        %v1966 = vld [vmem:[%s5 + $0x38] sm:$0xf]
        %v1967 = vld [vmem:[%s5 + $0x3c] sm:$0xf]
        %s1968 = scalar_lea.vmem %s5, 64
        %v1969 = vld [vmem:[%s1968] sm:$0xf]
        %v1970 = vld [vmem:[%s1968 + $0x4] sm:$0xf]
        %v1971 = vld [vmem:[%s1968 + $0x8] sm:$0xf]
        %v1972 = vld [vmem:[%s1968 + $0xc] sm:$0xf]
        %v1973 = vld [vmem:[%s1968 + $0x10] sm:$0xf]
        %v1974 = vld [vmem:[%s1968 + $0x14] sm:$0xf]
        %v1975 = vld [vmem:[%s1968 + $0x18] sm:$0xf]
        %v1976 = vld [vmem:[%s1968 + $0x1c] sm:$0xf]
        %v1977 = vld [vmem:[%s1968 + $0x20] sm:$0xf]
        %v1978 = vld [vmem:[%s1968 + $0x24] sm:$0xf]
        %v1979 = vld [vmem:[%s1968 + $0x28] sm:$0xf]
        %v1980 = vld [vmem:[%s1968 + $0x2c] sm:$0xf]
        %v1981 = vld [vmem:[%s1968 + $0x30] sm:$0xf]
        %v1982 = vld [vmem:[%s1968 + $0x34] sm:$0xf]
        %v1983 = vld [vmem:[%s1968 + $0x38] sm:$0xf]
        %v1984 = vld [vmem:[%s1968 + $0x3c] sm:$0xf]
        %v1986 = vshrl.u32 %v1951, 16
        %v2005 = vunpack.c.l.b16 %v1969
        %v2006 = vunpack.c.l.b16 %v1970
        %v2007 = vunpack.c.l.b16 %v1971
        %v2008 = vunpack.c.l.b16 %v1972
        %v2009 = vunpack.c.l.b16 %v1973
        %v2010 = vunpack.c.l.b16 %v1974
        %v2011 = vunpack.c.l.b16 %v1975
        %v2012 = vunpack.c.l.b16 %v1976
        %v2013 = vunpack.c.l.b16 %v1977
        %v2014 = vunpack.c.l.b16 %v1978
        %v2015 = vunpack.c.l.b16 %v1979
        %v2016 = vunpack.c.l.b16 %v1980
        %v2017 = vunpack.c.l.b16 %v1981
        %v2018 = vunpack.c.l.b16 %v1982
        %v2019 = vunpack.c.l.b16 %v1983
        %v2020 = vunpack.c.l.b16 %v1984
        %v2021 = vpack.c.b16 %v2006, %v2005
        %v2022 = vpack.c.b16 %v2008, %v2007
        %v2023 = vpack.c.b16 %v2010, %v2009
        %v2024 = vpack.c.b16 %v2012, %v2011
        %v2025 = vpack.c.b16 %v2014, %v2013
        %v2026 = vpack.c.b16 %v2016, %v2015
        %v2027 = vpack.c.b16 %v2018, %v2017
        %v2028 = vpack.c.b16 %v2020, %v2019
        %2037 = vmatprep.subr.bf16.mxu0 0
        %2038 = vmatpush1.bf16.msra.mxu0 %v2021
        %2039 = vmatprep.subr.bf16.mxu0 0
        %2040 = vmatpush1.bf16.msra.mxu0 %v2022
        %2041 = vmatprep.subr.bf16.mxu0 0
        %2042 = vmatpush1.bf16.msra.mxu0 %v2023
        %2043 = vmatprep.subr.bf16.mxu0 0
        %2044 = vmatpush1.bf16.msra.mxu0 %v2024
        %2045 = vmatprep.subr.bf16.mxu0 0
        %2046 = vmatpush1.bf16.msra.mxu0 %v2025
        %2047 = vmatprep.subr.bf16.mxu0 0
        %2048 = vmatpush1.bf16.msra.mxu0 %v2026
        %2049 = vmatprep.subr.bf16.mxu0 0
        %2050 = vmatpush1.bf16.msra.mxu0 %v2027
        %2051 = vmatprep.subr.bf16.mxu0 0
        %2052 = vmatpush1.bf16.msra.mxu0 %v2028
        %2053 = vmatprep.subr.bf16.mxu0 0
        %2054 = vmatpush1.bf16.msra.mxu0 0
        %2055 = vmatprep.subr.bf16.mxu0 0
        %2056 = vmatpush1.bf16.msra.mxu0 0
        %2057 = vmatprep.subr.bf16.mxu0 0
        %2058 = vmatpush1.bf16.msra.mxu0 0
        %2059 = vmatprep.subr.bf16.mxu0 0
        %2060 = vmatpush1.bf16.msra.mxu0 0
        %2061 = vmatprep.subr.bf16.mxu0 0
        %2062 = vmatpush1.bf16.msra.mxu0 0
        %2063 = vmatprep.subr.bf16.mxu0 0
        %2064 = vmatpush1.bf16.msra.mxu0 0
        %2065 = vmatprep.subr.bf16.mxu0 0
        %2066 = vmatpush1.bf16.msra.mxu0 0
        %2067 = vmatprep.subr.bf16.mxu0 0
        %2068 = vmatpush1.bf16.msra.mxu0 0
        %2069 = vmatprep.mubr.bf16.mxu0 0
        %2070 = vmatmul.mubr.bf16.gmra.mrb[0].mxu0 %v1986
        %v2071 = vpop.f32.mrb[0].mxu0
        %v2072 = vadd.f32 0.0, %v2071
        %v2073 = vpop.f32.mrb[0].mxu0
        %v2074 = vpop.f32.mrb[0].mxu0
        %v2075 = vpop.f32.mrb[0].mxu0
        %2076 = vdwg.mxu0
        %v2093 = vunpack.c.l.b16 %v1952
        %v2094 = vunpack.c.l.b16 %v1953
        %v2095 = vunpack.c.l.b16 %v1954
        %v2096 = vunpack.c.l.b16 %v1955
        %v2097 = vunpack.c.l.b16 %v1956
        %v2098 = vunpack.c.l.b16 %v1957
        %v2099 = vunpack.c.l.b16 %v1958
        %v2100 = vunpack.c.l.b16 %v1959
        %v2101 = vunpack.c.l.b16 %v1960
        %v2102 = vunpack.c.l.b16 %v1961
        %v2103 = vunpack.c.l.b16 %v1962
        %v2104 = vunpack.c.l.b16 %v1963
        %v2105 = vunpack.c.l.b16 %v1964
        %v2106 = vunpack.c.l.b16 %v1965
        %v2107 = vunpack.c.l.b16 %v1966
        %v2108 = vunpack.c.l.b16 %v1967
        %v2109 = vpack.c.b16 %v2094, %v2093
        %v2110 = vpack.c.b16 %v2096, %v2095
        %v2111 = vpack.c.b16 %v2098, %v2097
        %v2112 = vpack.c.b16 %v2100, %v2099
        %v2113 = vpack.c.b16 %v2102, %v2101
        %v2114 = vpack.c.b16 %v2104, %v2103
        %v2115 = vpack.c.b16 %v2106, %v2105
        %v2116 = vpack.c.b16 %v2108, %v2107
        %2125 = vmatprep.subr.bf16.mxu0 0
        %2126 = vmatpush1.bf16.msra.mxu0 %v2109
        %2127 = vmatprep.subr.bf16.mxu0 0
        %2128 = vmatpush1.bf16.msra.mxu0 %v2110
        %2129 = vmatprep.subr.bf16.mxu0 0
        %2130 = vmatpush1.bf16.msra.mxu0 %v2111
        %2131 = vmatprep.subr.bf16.mxu0 0
        %2132 = vmatpush1.bf16.msra.mxu0 %v2112
        %2133 = vmatprep.subr.bf16.mxu0 0
        %2134 = vmatpush1.bf16.msra.mxu0 %v2113
        %2135 = vmatprep.subr.bf16.mxu0 0
        %2136 = vmatpush1.bf16.msra.mxu0 %v2114
        %2137 = vmatprep.subr.bf16.mxu0 0
        %2138 = vmatpush1.bf16.msra.mxu0 %v2115
        %2139 = vmatprep.subr.bf16.mxu0 0
        %2140 = vmatpush1.bf16.msra.mxu0 %v2116
        %2141 = vmatprep.subr.bf16.mxu0 0
        %2142 = vmatpush1.bf16.msra.mxu0 0
        %2143 = vmatprep.subr.bf16.mxu0 0
        %2144 = vmatpush1.bf16.msra.mxu0 0
        %2145 = vmatprep.subr.bf16.mxu0 0
        %2146 = vmatpush1.bf16.msra.mxu0 0
        %2147 = vmatprep.subr.bf16.mxu0 0
        %2148 = vmatpush1.bf16.msra.mxu0 0
        %2149 = vmatprep.subr.bf16.mxu0 0
        %2150 = vmatpush1.bf16.msra.mxu0 0
        %2151 = vmatprep.subr.bf16.mxu0 0
        %2152 = vmatpush1.bf16.msra.mxu0 0
        %2153 = vmatprep.subr.bf16.mxu0 0
        %2154 = vmatpush1.bf16.msra.mxu0 0
        %2155 = vmatprep.subr.bf16.mxu0 0
        %2156 = vmatpush1.bf16.msra.mxu0 0
        %2157 = vmatprep.mubr.bf16.mxu0 0
        %2158 = vmatmul.mubr.bf16.gmra.mrb[0].mxu0 %v1951
        %v2159 = vpop.f32.mrb[0].mxu0
        %v2160 = vadd.f32 %v2072, %v2159
        %v2161 = vpop.f32.mrb[0].mxu0
        %v2162 = vpop.f32.mrb[0].mxu0
        %v2163 = vpop.f32.mrb[0].mxu0
        %2164 = vdwg.mxu0
        %s2165 = scalar_lea.vmem %s5, 128
        %v2166 = vld [vmem:[%s2165] sm:$0xf]
        %v2167 = vld [vmem:[%s2165 + $0x4] sm:$0xf]
        %v2168 = vld [vmem:[%s2165 + $0x8] sm:$0xf]
        %v2169 = vld [vmem:[%s2165 + $0xc] sm:$0xf]
        %v2170 = vld [vmem:[%s2165 + $0x10] sm:$0xf]
        %v2171 = vld [vmem:[%s2165 + $0x14] sm:$0xf]
        %v2172 = vld [vmem:[%s2165 + $0x18] sm:$0xf]
        %v2173 = vld [vmem:[%s2165 + $0x1c] sm:$0xf]
        %v2174 = vld [vmem:[%s2165 + $0x20] sm:$0xf]
        %v2175 = vld [vmem:[%s2165 + $0x24] sm:$0xf]
        %v2176 = vld [vmem:[%s2165 + $0x28] sm:$0xf]
        %v2177 = vld [vmem:[%s2165 + $0x2c] sm:$0xf]
        %v2178 = vld [vmem:[%s2165 + $0x30] sm:$0xf]
        %v2179 = vld [vmem:[%s2165 + $0x34] sm:$0xf]
        %v2180 = vld [vmem:[%s2165 + $0x38] sm:$0xf]
        %v2181 = vld [vmem:[%s2165 + $0x3c] sm:$0xf]
        %v2183 = vrot.slane %v1951, 1
        %v2201 = vunpack.c.l.b16 %v2166
        %v2202 = vunpack.c.l.b16 %v2167
        %v2203 = vunpack.c.l.b16 %v2168
        %v2204 = vunpack.c.l.b16 %v2169
        %v2205 = vunpack.c.l.b16 %v2170
        %v2206 = vunpack.c.l.b16 %v2171
        %v2207 = vunpack.c.l.b16 %v2172
        %v2208 = vunpack.c.l.b16 %v2173
        %v2209 = vunpack.c.l.b16 %v2174
        %v2210 = vunpack.c.l.b16 %v2175
        %v2211 = vunpack.c.l.b16 %v2176
        %v2212 = vunpack.c.l.b16 %v2177
        %v2213 = vunpack.c.l.b16 %v2178
        %v2214 = vunpack.c.l.b16 %v2179
        %v2215 = vunpack.c.l.b16 %v2180
        %v2216 = vunpack.c.l.b16 %v2181
        %v2217 = vpack.c.b16 %v2202, %v2201
        %v2218 = vpack.c.b16 %v2204, %v2203
        %v2219 = vpack.c.b16 %v2206, %v2205
        %v2220 = vpack.c.b16 %v2208, %v2207
        %v2221 = vpack.c.b16 %v2210, %v2209
        %v2222 = vpack.c.b16 %v2212, %v2211
        %v2223 = vpack.c.b16 %v2214, %v2213
        %v2224 = vpack.c.b16 %v2216, %v2215
        %2233 = vmatprep.subr.bf16.mxu0 0
        %2234 = vmatpush1.bf16.msra.mxu0 %v2217
        %2235 = vmatprep.subr.bf16.mxu0 0
        %2236 = vmatpush1.bf16.msra.mxu0 %v2218
        %2237 = vmatprep.subr.bf16.mxu0 0
        %2238 = vmatpush1.bf16.msra.mxu0 %v2219
        %2239 = vmatprep.subr.bf16.mxu0 0
        %2240 = vmatpush1.bf16.msra.mxu0 %v2220
        %2241 = vmatprep.subr.bf16.mxu0 0
        %2242 = vmatpush1.bf16.msra.mxu0 %v2221
        %2243 = vmatprep.subr.bf16.mxu0 0
        %2244 = vmatpush1.bf16.msra.mxu0 %v2222
        %2245 = vmatprep.subr.bf16.mxu0 0
        %2246 = vmatpush1.bf16.msra.mxu0 %v2223
        %2247 = vmatprep.subr.bf16.mxu0 0
        %2248 = vmatpush1.bf16.msra.mxu0 %v2224
        %2249 = vmatprep.subr.bf16.mxu0 0
        %2250 = vmatpush1.bf16.msra.mxu0 0
        %2251 = vmatprep.subr.bf16.mxu0 0
        %2252 = vmatpush1.bf16.msra.mxu0 0
        %2253 = vmatprep.subr.bf16.mxu0 0
        %2254 = vmatpush1.bf16.msra.mxu0 0
        %2255 = vmatprep.subr.bf16.mxu0 0
        %2256 = vmatpush1.bf16.msra.mxu0 0
        %2257 = vmatprep.subr.bf16.mxu0 0
        %2258 = vmatpush1.bf16.msra.mxu0 0
        %2259 = vmatprep.subr.bf16.mxu0 0
        %2260 = vmatpush1.bf16.msra.mxu0 0
        %2261 = vmatprep.subr.bf16.mxu0 0
        %2262 = vmatpush1.bf16.msra.mxu0 0
        %2263 = vmatprep.subr.bf16.mxu0 0
        %2264 = vmatpush1.bf16.msra.mxu0 0
        %2265 = vmatprep.mubr.bf16.mxu0 0
        %2266 = vmatmul.mubr.bf16.gmra.mrb[0].mxu0 %v2183
        %v2267 = vpop.f32.mrb[0].mxu0
        %v2268 = vadd.f32 0.0, %v2267
        %v2269 = vpop.f32.mrb[0].mxu0
        %v2270 = vpop.f32.mrb[0].mxu0
        %v2271 = vpop.f32.mrb[0].mxu0
        %2272 = vdwg.mxu0
        %v2273 = vadd.f32 %v2160, %v2268
        %s2274 = scalar_lea.vmem %s5, 192
        %v2275 = vld [vmem:[%s2274] sm:$0xf]
        %v2276 = vld [vmem:[%s2274 + $0x4] sm:$0xf]
        %v2277 = vld [vmem:[%s2274 + $0x8] sm:$0xf]
        %v2278 = vld [vmem:[%s2274 + $0xc] sm:$0xf]
        %v2279 = vld [vmem:[%s2274 + $0x10] sm:$0xf]
        %v2280 = vld [vmem:[%s2274 + $0x14] sm:$0xf]
        %v2281 = vld [vmem:[%s2274 + $0x18] sm:$0xf]
        %v2282 = vld [vmem:[%s2274 + $0x1c] sm:$0xf]
        %v2283 = vld [vmem:[%s2274 + $0x20] sm:$0xf]
        %v2284 = vld [vmem:[%s2274 + $0x24] sm:$0xf]
        %v2285 = vld [vmem:[%s2274 + $0x28] sm:$0xf]
        %v2286 = vld [vmem:[%s2274 + $0x2c] sm:$0xf]
        %v2287 = vld [vmem:[%s2274 + $0x30] sm:$0xf]
        %v2288 = vld [vmem:[%s2274 + $0x34] sm:$0xf]
        %v2289 = vld [vmem:[%s2274 + $0x38] sm:$0xf]
        %v2290 = vld [vmem:[%s2274 + $0x3c] sm:$0xf]
        %v2291 = vrot.slane %v1986, 1
        %v2309 = vunpack.c.l.b16 %v2275
        %v2310 = vunpack.c.l.b16 %v2276
        %v2311 = vunpack.c.l.b16 %v2277
        %v2312 = vunpack.c.l.b16 %v2278
        %v2313 = vunpack.c.l.b16 %v2279
        %v2314 = vunpack.c.l.b16 %v2280
        %v2315 = vunpack.c.l.b16 %v2281
        %v2316 = vunpack.c.l.b16 %v2282
        %v2317 = vunpack.c.l.b16 %v2283
        %v2318 = vunpack.c.l.b16 %v2284
        %v2319 = vunpack.c.l.b16 %v2285
        %v2320 = vunpack.c.l.b16 %v2286
        %v2321 = vunpack.c.l.b16 %v2287
        %v2322 = vunpack.c.l.b16 %v2288
        %v2323 = vunpack.c.l.b16 %v2289
        %v2324 = vunpack.c.l.b16 %v2290
        %v2325 = vpack.c.b16 %v2310, %v2309
        %v2326 = vpack.c.b16 %v2312, %v2311
        %v2327 = vpack.c.b16 %v2314, %v2313
        %v2328 = vpack.c.b16 %v2316, %v2315
        %v2329 = vpack.c.b16 %v2318, %v2317
        %v2330 = vpack.c.b16 %v2320, %v2319
        %v2331 = vpack.c.b16 %v2322, %v2321
        %v2332 = vpack.c.b16 %v2324, %v2323
        %2341 = vmatprep.subr.bf16.mxu0 0
        %2342 = vmatpush1.bf16.msra.mxu0 %v2325
        %2343 = vmatprep.subr.bf16.mxu0 0
        %2344 = vmatpush1.bf16.msra.mxu0 %v2326
        %2345 = vmatprep.subr.bf16.mxu0 0
        %2346 = vmatpush1.bf16.msra.mxu0 %v2327
        %2347 = vmatprep.subr.bf16.mxu0 0
        %2348 = vmatpush1.bf16.msra.mxu0 %v2328
        %2349 = vmatprep.subr.bf16.mxu0 0
        %2350 = vmatpush1.bf16.msra.mxu0 %v2329
        %2351 = vmatprep.subr.bf16.mxu0 0
        %2352 = vmatpush1.bf16.msra.mxu0 %v2330
        %2353 = vmatprep.subr.bf16.mxu0 0
        %2354 = vmatpush1.bf16.msra.mxu0 %v2331
        %2355 = vmatprep.subr.bf16.mxu0 0
        %2356 = vmatpush1.bf16.msra.mxu0 %v2332
        %2357 = vmatprep.subr.bf16.mxu0 0
        %2358 = vmatpush1.bf16.msra.mxu0 0
        %2359 = vmatprep.subr.bf16.mxu0 0
        %2360 = vmatpush1.bf16.msra.mxu0 0
        %2361 = vmatprep.subr.bf16.mxu0 0
        %2362 = vmatpush1.bf16.msra.mxu0 0
        %2363 = vmatprep.subr.bf16.mxu0 0
        %2364 = vmatpush1.bf16.msra.mxu0 0
        %2365 = vmatprep.subr.bf16.mxu0 0
        %2366 = vmatpush1.bf16.msra.mxu0 0
        %2367 = vmatprep.subr.bf16.mxu0 0
        %2368 = vmatpush1.bf16.msra.mxu0 0
        %2369 = vmatprep.subr.bf16.mxu0 0
        %2370 = vmatpush1.bf16.msra.mxu0 0
        %2371 = vmatprep.subr.bf16.mxu0 0
        %2372 = vmatpush1.bf16.msra.mxu0 0
        %2373 = vmatprep.mubr.bf16.mxu0 0
        %2374 = vmatmul.mubr.bf16.gmra.mrb[0].mxu0 %v2291
        %v2375 = vpop.f32.mrb[0].mxu0
        %v2376 = vadd.f32 0.0, %v2375
        %v2377 = vpop.f32.mrb[0].mxu0
        %v2378 = vpop.f32.mrb[0].mxu0
        %v2379 = vpop.f32.mrb[0].mxu0
        %2380 = vdwg.mxu0
        %v2381 = vadd.f32 %v2273, %v2376
        %s2382 = scalar_lea.vmem %s5, 256
        %v2383 = vld [vmem:[%s2382] sm:$0xf]
        %v2384 = vld [vmem:[%s2382 + $0x4] sm:$0xf]
        %v2385 = vld [vmem:[%s2382 + $0x8] sm:$0xf]
        %v2386 = vld [vmem:[%s2382 + $0xc] sm:$0xf]
        %v2387 = vld [vmem:[%s2382 + $0x10] sm:$0xf]
        %v2388 = vld [vmem:[%s2382 + $0x14] sm:$0xf]
        %v2389 = vld [vmem:[%s2382 + $0x18] sm:$0xf]
        %v2390 = vld [vmem:[%s2382 + $0x1c] sm:$0xf]
        %v2391 = vld [vmem:[%s2382 + $0x20] sm:$0xf]
        %v2392 = vld [vmem:[%s2382 + $0x24] sm:$0xf]
        %v2393 = vld [vmem:[%s2382 + $0x28] sm:$0xf]
        %v2394 = vld [vmem:[%s2382 + $0x2c] sm:$0xf]
        %v2395 = vld [vmem:[%s2382 + $0x30] sm:$0xf]
        %v2396 = vld [vmem:[%s2382 + $0x34] sm:$0xf]
        %v2397 = vld [vmem:[%s2382 + $0x38] sm:$0xf]
        %v2398 = vld [vmem:[%s2382 + $0x3c] sm:$0xf]
        %v2399 = vrot.slane %v1951, 2
        %v2417 = vunpack.c.l.b16 %v2383
        %v2418 = vunpack.c.l.b16 %v2384
        %v2419 = vunpack.c.l.b16 %v2385
        %v2420 = vunpack.c.l.b16 %v2386
        %v2421 = vunpack.c.l.b16 %v2387
        %v2422 = vunpack.c.l.b16 %v2388
        %v2423 = vunpack.c.l.b16 %v2389
        %v2424 = vunpack.c.l.b16 %v2390
        %v2425 = vunpack.c.l.b16 %v2391
        %v2426 = vunpack.c.l.b16 %v2392
        %v2427 = vunpack.c.l.b16 %v2393
        %v2428 = vunpack.c.l.b16 %v2394
        %v2429 = vunpack.c.l.b16 %v2395
        %v2430 = vunpack.c.l.b16 %v2396
        %v2431 = vunpack.c.l.b16 %v2397
        %v2432 = vunpack.c.l.b16 %v2398
        %v2433 = vpack.c.b16 %v2418, %v2417
        %v2434 = vpack.c.b16 %v2420, %v2419
        %v2435 = vpack.c.b16 %v2422, %v2421
        %v2436 = vpack.c.b16 %v2424, %v2423
        %v2437 = vpack.c.b16 %v2426, %v2425
        %v2438 = vpack.c.b16 %v2428, %v2427
        %v2439 = vpack.c.b16 %v2430, %v2429
        %v2440 = vpack.c.b16 %v2432, %v2431
        %2449 = vmatprep.subr.bf16.mxu0 0
        %2450 = vmatpush1.bf16.msra.mxu0 %v2433
        %2451 = vmatprep.subr.bf16.mxu0 0
        %2452 = vmatpush1.bf16.msra.mxu0 %v2434
        %2453 = vmatprep.subr.bf16.mxu0 0
        %2454 = vmatpush1.bf16.msra.mxu0 %v2435
        %2455 = vmatprep.subr.bf16.mxu0 0
        %2456 = vmatpush1.bf16.msra.mxu0 %v2436
        %2457 = vmatprep.subr.bf16.mxu0 0
        %2458 = vmatpush1.bf16.msra.mxu0 %v2437
        %2459 = vmatprep.subr.bf16.mxu0 0
        %2460 = vmatpush1.bf16.msra.mxu0 %v2438
        %2461 = vmatprep.subr.bf16.mxu0 0
        %2462 = vmatpush1.bf16.msra.mxu0 %v2439
        %2463 = vmatprep.subr.bf16.mxu0 0
        %2464 = vmatpush1.bf16.msra.mxu0 %v2440
        %2465 = vmatprep.subr.bf16.mxu0 0
        %2466 = vmatpush1.bf16.msra.mxu0 0
        %2467 = vmatprep.subr.bf16.mxu0 0
        %2468 = vmatpush1.bf16.msra.mxu0 0
        %2469 = vmatprep.subr.bf16.mxu0 0
        %2470 = vmatpush1.bf16.msra.mxu0 0
        %2471 = vmatprep.subr.bf16.mxu0 0
        %2472 = vmatpush1.bf16.msra.mxu0 0
        %2473 = vmatprep.subr.bf16.mxu0 0
        %2474 = vmatpush1.bf16.msra.mxu0 0
        %2475 = vmatprep.subr.bf16.mxu0 0
        %2476 = vmatpush1.bf16.msra.mxu0 0
        %2477 = vmatprep.subr.bf16.mxu0 0
        %2478 = vmatpush1.bf16.msra.mxu0 0
        %2479 = vmatprep.subr.bf16.mxu0 0
        %2480 = vmatpush1.bf16.msra.mxu0 0
        %2481 = vmatprep.mubr.bf16.mxu0 0
        %2482 = vmatmul.mubr.bf16.gmra.mrb[0].mxu0 %v2399
        %v2483 = vpop.f32.mrb[0].mxu0
        %v2484 = vadd.f32 0.0, %v2483
        %v2485 = vpop.f32.mrb[0].mxu0
        %v2486 = vpop.f32.mrb[0].mxu0
        %v2487 = vpop.f32.mrb[0].mxu0
        %2488 = vdwg.mxu0
        %v2489 = vadd.f32 %v2381, %v2484
        %v2490 = vld [vmem:[%s6] sm:$0x1]
        %v2491 = vadd.f32 %v2489, %v2490
        %v2492 = vmax.f32 %v2491, 0.0
        %v2493 = vpack.c.bf16 %v2492, %v2492
        %v2494 = vld [vmem:[%s7] sm:$0xf]
        %v2495 = vld [vmem:[%s7 + $0x4] sm:$0xf]
        %v2496 = vld [vmem:[%s7 + $0x8] sm:$0xf]
        %v2497 = vld [vmem:[%s7 + $0xc] sm:$0xf]
        %v2498 = vld [vmem:[%s7 + $0x10] sm:$0xf]
        %v2499 = vld [vmem:[%s7 + $0x14] sm:$0xf]
        %v2500 = vld [vmem:[%s7 + $0x18] sm:$0xf]
        %v2501 = vld [vmem:[%s7 + $0x1c] sm:$0xf]
        %v2502 = vld [vmem:[%s7 + $0x20] sm:$0xf]
        %v2503 = vld [vmem:[%s7 + $0x24] sm:$0xf]
        %v2504 = vld [vmem:[%s7 + $0x28] sm:$0xf]
        %v2505 = vld [vmem:[%s7 + $0x2c] sm:$0xf]
        %v2506 = vld [vmem:[%s7 + $0x30] sm:$0xf]
        %v2507 = vld [vmem:[%s7 + $0x34] sm:$0xf]
        %v2508 = vld [vmem:[%s7 + $0x38] sm:$0xf]
        %v2509 = vld [vmem:[%s7 + $0x3c] sm:$0xf]
        %v2510 = vld [vmem:[%s8] sm:$0x1]
        %v2527 = vunpack.c.l.b16 %v2494
        %v2528 = vunpack.c.l.b16 %v2495
        %v2529 = vunpack.c.l.b16 %v2496
        %v2530 = vunpack.c.l.b16 %v2497
        %v2531 = vunpack.c.l.b16 %v2498
        %v2532 = vunpack.c.l.b16 %v2499
        %v2533 = vunpack.c.l.b16 %v2500
        %v2534 = vunpack.c.l.b16 %v2501
        %v2535 = vunpack.c.l.b16 %v2502
        %v2536 = vunpack.c.l.b16 %v2503
        %v2537 = vunpack.c.l.b16 %v2504
        %v2538 = vunpack.c.l.b16 %v2505
        %v2539 = vunpack.c.l.b16 %v2506
        %v2540 = vunpack.c.l.b16 %v2507
        %v2541 = vunpack.c.l.b16 %v2508
        %v2542 = vunpack.c.l.b16 %v2509
        %v2543 = vpack.c.b16 %v2528, %v2527
        %v2544 = vpack.c.b16 %v2530, %v2529
        %v2545 = vpack.c.b16 %v2532, %v2531
        %v2546 = vpack.c.b16 %v2534, %v2533
        %v2547 = vpack.c.b16 %v2536, %v2535
        %v2548 = vpack.c.b16 %v2538, %v2537
        %v2549 = vpack.c.b16 %v2540, %v2539
        %v2550 = vpack.c.b16 %v2542, %v2541
        %2559 = vmatprep.subr.bf16.mxu0 0
        %2560 = vmatpush1.bf16.msra.mxu0 %v2543
        %2561 = vmatprep.subr.bf16.mxu0 0
        %2562 = vmatpush1.bf16.msra.mxu0 %v2544
        %2563 = vmatprep.subr.bf16.mxu0 0
        %2564 = vmatpush1.bf16.msra.mxu0 %v2545
        %2565 = vmatprep.subr.bf16.mxu0 0
        %2566 = vmatpush1.bf16.msra.mxu0 %v2546
        %2567 = vmatprep.subr.bf16.mxu0 0
        %2568 = vmatpush1.bf16.msra.mxu0 %v2547
        %2569 = vmatprep.subr.bf16.mxu0 0
        %2570 = vmatpush1.bf16.msra.mxu0 %v2548
        %2571 = vmatprep.subr.bf16.mxu0 0
        %2572 = vmatpush1.bf16.msra.mxu0 %v2549
        %2573 = vmatprep.subr.bf16.mxu0 0
        %2574 = vmatpush1.bf16.msra.mxu0 %v2550
        %2575 = vmatprep.subr.bf16.mxu0 0
        %2576 = vmatpush1.bf16.msra.mxu0 0
        %2577 = vmatprep.subr.bf16.mxu0 0
        %2578 = vmatpush1.bf16.msra.mxu0 0
        %2579 = vmatprep.subr.bf16.mxu0 0
        %2580 = vmatpush1.bf16.msra.mxu0 0
        %2581 = vmatprep.subr.bf16.mxu0 0
        %2582 = vmatpush1.bf16.msra.mxu0 0
        %2583 = vmatprep.subr.bf16.mxu0 0
        %2584 = vmatpush1.bf16.msra.mxu0 0
        %2585 = vmatprep.subr.bf16.mxu0 0
        %2586 = vmatpush1.bf16.msra.mxu0 0
        %2587 = vmatprep.subr.bf16.mxu0 0
        %2588 = vmatpush1.bf16.msra.mxu0 0
        %2589 = vmatprep.subr.bf16.mxu0 0
        %2590 = vmatpush1.bf16.msra.mxu0 0
        %2591 = vmatprep.mubr.bf16.mxu0 0
        %2592 = vmatmul.mubr.bf16.gmra.mrb[0].mxu0 %v2493
        %v2593 = vpop.f32.mrb[0].mxu0
        %v2594 = vadd.f32 %v2510, %v2593
        %v2595 = vpop.f32.mrb[0].mxu0
        %v2596 = vpop.f32.mrb[0].mxu0
        %v2597 = vpop.f32.mrb[0].mxu0
        %2598 = vdwg.mxu0
        %v2599 = vmax.f32 %v2594, 0.0
        %v2600 = vpack.c.bf16 %v2599, %v2599
        %v2601 = vld [vmem:[%s9] sm:$0xf]
        %v2602 = vld [vmem:[%s9 + $0x4] sm:$0xf]
        %v2603 = vld [vmem:[%s9 + $0x8] sm:$0xf]
        %v2604 = vld [vmem:[%s9 + $0xc] sm:$0xf]
        %v2605 = vld [vmem:[%s9 + $0x10] sm:$0xf]
        %v2606 = vld [vmem:[%s9 + $0x14] sm:$0xf]
        %v2607 = vld [vmem:[%s9 + $0x18] sm:$0xf]
        %v2608 = vld [vmem:[%s9 + $0x1c] sm:$0xf]
        %v2609 = vld [vmem:[%s9 + $0x20] sm:$0xf]
        %v2610 = vld [vmem:[%s9 + $0x24] sm:$0xf]
        %v2611 = vld [vmem:[%s9 + $0x28] sm:$0xf]
        %v2612 = vld [vmem:[%s9 + $0x2c] sm:$0xf]
        %v2613 = vld [vmem:[%s9 + $0x30] sm:$0xf]
        %v2614 = vld [vmem:[%s9 + $0x34] sm:$0xf]
        %v2615 = vld [vmem:[%s9 + $0x38] sm:$0xf]
        %v2616 = vld [vmem:[%s9 + $0x3c] sm:$0xf]
        %v2617 = vld [vmem:[%s10] sm:$0x1]
        %v2634 = vunpack.c.l.b16 %v2601
        %v2635 = vunpack.c.l.b16 %v2602
        %v2636 = vunpack.c.l.b16 %v2603
        %v2637 = vunpack.c.l.b16 %v2604
        %v2638 = vunpack.c.l.b16 %v2605
        %v2639 = vunpack.c.l.b16 %v2606
        %v2640 = vunpack.c.l.b16 %v2607
        %v2641 = vunpack.c.l.b16 %v2608
        %v2642 = vunpack.c.l.b16 %v2609
        %v2643 = vunpack.c.l.b16 %v2610
        %v2644 = vunpack.c.l.b16 %v2611
        %v2645 = vunpack.c.l.b16 %v2612
        %v2646 = vunpack.c.l.b16 %v2613
        %v2647 = vunpack.c.l.b16 %v2614
        %v2648 = vunpack.c.l.b16 %v2615
        %v2649 = vunpack.c.l.b16 %v2616
        %v2650 = vpack.c.b16 %v2635, %v2634
        %v2651 = vpack.c.b16 %v2637, %v2636
        %v2652 = vpack.c.b16 %v2639, %v2638
        %v2653 = vpack.c.b16 %v2641, %v2640
        %v2654 = vpack.c.b16 %v2643, %v2642
        %v2655 = vpack.c.b16 %v2645, %v2644
        %v2656 = vpack.c.b16 %v2647, %v2646
        %v2657 = vpack.c.b16 %v2649, %v2648
        %2666 = vmatprep.subr.bf16.mxu0 0
        %2667 = vmatpush1.bf16.msra.mxu0 %v2650
        %2668 = vmatprep.subr.bf16.mxu0 0
        %2669 = vmatpush1.bf16.msra.mxu0 %v2651
        %2670 = vmatprep.subr.bf16.mxu0 0
        %2671 = vmatpush1.bf16.msra.mxu0 %v2652
        %2672 = vmatprep.subr.bf16.mxu0 0
        %2673 = vmatpush1.bf16.msra.mxu0 %v2653
        %2674 = vmatprep.subr.bf16.mxu0 0
        %2675 = vmatpush1.bf16.msra.mxu0 %v2654
        %2676 = vmatprep.subr.bf16.mxu0 0
        %2677 = vmatpush1.bf16.msra.mxu0 %v2655
        %2678 = vmatprep.subr.bf16.mxu0 0
        %2679 = vmatpush1.bf16.msra.mxu0 %v2656
        %2680 = vmatprep.subr.bf16.mxu0 0
        %2681 = vmatpush1.bf16.msra.mxu0 %v2657
        %2682 = vmatprep.subr.bf16.mxu0 0
        %2683 = vmatpush1.bf16.msra.mxu0 0
        %2684 = vmatprep.subr.bf16.mxu0 0
        %2685 = vmatpush1.bf16.msra.mxu0 0
        %2686 = vmatprep.subr.bf16.mxu0 0
        %2687 = vmatpush1.bf16.msra.mxu0 0
        %2688 = vmatprep.subr.bf16.mxu0 0
        %2689 = vmatpush1.bf16.msra.mxu0 0
        %2690 = vmatprep.subr.bf16.mxu0 0
        %2691 = vmatpush1.bf16.msra.mxu0 0
        %2692 = vmatprep.subr.bf16.mxu0 0
        %2693 = vmatpush1.bf16.msra.mxu0 0
        %2694 = vmatprep.subr.bf16.mxu0 0
        %2695 = vmatpush1.bf16.msra.mxu0 0
        %2696 = vmatprep.subr.bf16.mxu0 0
        %2697 = vmatpush1.bf16.msra.mxu0 0
        %2698 = vmatprep.mubr.bf16.mxu0 0
        %2699 = vmatmul.mubr.bf16.gmra.mrb[0].mxu0 %v2600
        %v2700 = vpop.f32.mrb[0].mxu0
        %v2701 = vadd.f32 %v2617, %v2700
        %v2702 = vpop.f32.mrb[0].mxu0
        %v2703 = vpop.f32.mrb[0].mxu0
        %v2704 = vpop.f32.mrb[0].mxu0
        %2705 = vdwg.mxu0
        %2706 = vst [vmem:[%s378] sm:$0x1] %v2701
        %s2707 = sand.u32 %s269, 1
        %s2708 = scalar_lea.sflag [#allocation3], %s2707
        %s2709 = sand.u32 %s269, 1
        %s2710 = scalar_lea.vmem [#allocation2], %s2709
        // Predicated region
        $region65: #{net_forward.1} parent=63 // pred_check
          %p2711 = pneg %p279
        $region66: #{net_forward.1} parent=63 // pred_check_branch
          %2713 = sbr.rel (%p2711) target = $region68
        $region67: #{net_forward.1} parent=63 // pred_region
          %s2715 = ssub.s32 16, 16
          %2716 = vsyncadd %s2708, %s2715
          %s2717 = smul.addr %s25, 16
          %s2718 = scalar_lea.hbm %s11, %s2717
          %s2720 = sshll.u32 %s2710, 4
          %s2721 = int_to_ptr.vmem [resolvable:$true] %s2720
          %2723 = dma.vmem_to_hbm [thread:$0]  %s2721, 16, %s2718, %s2708
        $region68: #{net_forward.1} parent=63 // pred_fallthru
          _
      $region64: #{net_forward.1} parent=5 // pred_fallthru
        _
      %p2724 = scmp.le.s32.totalorder 2, %s20
      // Predicated region
      $region69: #{net_forward.1} parent=5 // pred_check
        %p2725 = pneg %p2724
      $region70: #{net_forward.1} parent=5 // pred_check_branch
        %2727 = sbr.rel (%p2725) target = $region72
      $region71: #{net_forward.1} parent=5 // pred_region
        %s2728 = ssub.s32 %s20, 2
        // Predicated region
        $region73: #{net_forward.1} parent=71 // pred_check
          %p2729 = pneg %p285
        $region74: #{net_forward.1} parent=71 // pred_check_branch
          %2731 = sbr.rel (%p2729) target = $region76
        $region75: #{net_forward.1} parent=71 // pred_region
          %s2732 = sand.u32 %s270, 1
          %s2733 = scalar_lea.sflag [#allocation3], %s2732
          %s2734 = sand.u32 %s270, 1
          %s2735 = scalar_lea.vmem [#allocation2], %s2734
          %2736 = dma.done %s2733, 16
        $region76: #{net_forward.1} parent=71 // pred_fallthru
          _
      $region72: #{net_forward.1} parent=5 // pred_fallthru
        _
    $region6: #{net_forward.1} parent=1 // loop_footer
      %s24 = sadd.s32 1, %s20
    $region7: #{net_forward.1} parent=1 // loop_footer_branch
      %19 = sbr.rel target = $region3
    $region8: #{net_forward.1} parent=1 // loop_exit
      _
    %2737 = vsyncpa [#allocation3], 1
    %s2738 = scalar_lea.sflag [#allocation3], 1
    %2739 = vsyncpa %s2738, 1

</llo_original>
